<compile_context>
chip_gen: v5e
topology: v5e:2x2
jax: 0.10.0
libtpu: 0.0.40
codegen_flags: <defaults>
</compile_context>

<pallas_src>
import functools

import jax
import jax.numpy as jnp
from jax import lax
from jax.experimental import pallas as pl
from jax.experimental.pallas import tpu as pltpu


def _silu(v):
    return v * jax.nn.sigmoid(v)


def _round_up(n, m):
    return ((n + m - 1) // m) * m


def _cdiv(a, b):
    return (a + b - 1) // b


def _tpu_vmem_capacity():
    """Physical VMEM bytes per core (fallback: 64 MiB, the smallest = v7x)."""
    try:
        info = pltpu.get_tpu_info()
        cap = getattr(info, "vmem_capacity_bytes", None)
        if cap:
            return int(cap)
    except Exception:
        pass
    return 64 * 1024 * 1024


def _spec(shape, index_map, *, single_buffer=False):
    """BlockSpec; grid-invariant operands request a single pipeline buffer."""
    if single_buffer:
        try:
            return pl.BlockSpec(shape, index_map, pipeline_mode=pl.Buffered(1))
        except Exception:   # older jax without pipeline_mode: default buffering
            pass
    return pl.BlockSpec(shape, index_map)


def _kaln_kernel(order, out_f, tile_n, n_tiles, matmul_dtype, precision,
                 norm_ref, x_ref, w_ref, aux_ref, o_ref, parts_ref, acc_ref):
    j = pl.program_id(1)
    D = order + 1

    # Build [silu(x), P1, ..., P_order] once per batch tile; cache in VMEM
    # (already in the matmul dtype) so out tiles j>0 reuse it for free.
    @pl.when(j == 0)
    def _build_basis():
        x = x_ref[...].astype(jnp.float32)
        parts_ref[0] = _silu(x).astype(matmul_dtype)
        if order >= 1:
            xn = x * norm_ref[0] + norm_ref[1]          # global min/max norm
            parts_ref[1] = xn.astype(matmul_dtype)
            p_nm2, p_nm1 = jnp.ones_like(xn), xn
            for n in range(1, order):
                p_n = ((2.0 * n + 1.0) * xn * p_nm1 - float(n) * p_nm2) / (n + 1.0)
                parts_ref[n + 1] = p_n.astype(matmul_dtype)
                p_nm2, p_nm1 = p_nm1, p_n

    # D accumulating MXU matmuls for this out tile (f32 accumulation).  The
    # per-degree form avoids a lane-axis concat and keeps only one
    # (tile_b, in_f) operand live at a time.
    y = jnp.dot(parts_ref[0], w_ref[0], precision=precision,
                preferred_element_type=jnp.float32)
    for d in range(1, D):
        y = y + jnp.dot(parts_ref[d], w_ref[d], precision=precision,
                        preferred_element_type=jnp.float32)
    acc_ref[j] = y

    # Epilogue after the last out tile: bias0 (folded P0 column sums), one-pass
    # LayerNorm over the REAL out_features (padded columns are exactly zero so
    # they do not perturb the sums), affine, SiLU, lane-dense unmasked stores.
    @pl.when(j == n_tiles - 1)
    def _epilogue():
        inv_n = jnp.float32(1.0 / out_f)
        rows = acc_ref.shape[1]
        s1 = jnp.zeros((rows, 1), jnp.float32)
        s2 = jnp.zeros((rows, 1), jnp.float32)
        for t in range(n_tiles):
            y_t = acc_ref[t] + aux_ref[0:1, t * tile_n:(t + 1) * tile_n]
            s1 = s1 + jnp.sum(y_t, axis=-1, keepdims=True)
            s2 = s2 + jnp.sum(y_t * y_t, axis=-1, keepdims=True)
        mean = s1 * inv_n
        var = jnp.maximum(s2 * inv_n - mean * mean, 0.0)
        rstd = lax.rsqrt(var + 1e-5)
        for t in range(n_tiles):
            cols = slice(t * tile_n, (t + 1) * tile_n)
            y_t = acc_ref[t] + aux_ref[0:1, cols]
            yn = (y_t - mean) * rstd * aux_ref[1:2, cols] + aux_ref[2:3, cols]
            o_ref[:, cols] = _silu(yn).astype(o_ref.dtype)


def prepare_kaln_params(params, spline_order, *, matmul_dtype=jnp.bfloat16,
                        tile_n=None):
    """One-time weight repack.  Call once and reuse across forward calls."""
    base_w = jnp.asarray(params["base_weight"])
    poly_w = jnp.asarray(params["poly_weight"])
    ln_w = jnp.asarray(params["ln_weight"])
    ln_b = jnp.asarray(params["ln_bias"])

    out_f, in_f = base_w.shape
    D = spline_order + 1
    assert poly_w.shape == (out_f, in_f * D)

    out_p = _round_up(out_f, 128)                    # lane-dense output width
    mm_isz = jnp.dtype(matmul_dtype).itemsize
    if tile_n is None:
        # Largest 128-multiple out tile whose (possibly double-buffered)
        # weight block stays within a fraction of physical VMEM.
        vmem_cap = _tpu_vmem_capacity()
        col_bytes = max(1, D * in_f * mm_isz)
        w_target = max(vmem_cap // 6, 4 << 20)
        if col_bytes * out_p <= w_target:
            tile_n = out_p
        else:
            tile_n = max(128, ((w_target // 2) // col_bytes) // 128 * 128)
    tile_n = min(max(128, (int(tile_n) // 128) * 128), out_p)
    out_pp = _round_up(out_p, tile_n)
    n_tiles = out_pp // tile_n

    # torch flatten order is feature-major, degree-minor:
    #   poly_weight[o, i*D + d] == poly_w3[o, i, d]
    poly_w3 = poly_w.reshape(out_f, in_f, D).astype(jnp.float32)
    bias0 = jnp.sum(poly_w3[:, :, 0], axis=1)        # P0 == 1 contribution
    blocks = [base_w.astype(jnp.float32).T]
    blocks += [poly_w3[:, :, d].T for d in range(1, D)]
    w_fused = jnp.stack(blocks, axis=0)              # (D, in_f, out_f)
    w_fused = jnp.pad(w_fused, ((0, 0), (0, 0), (0, out_pp - out_f)))
    w_fused = w_fused.astype(matmul_dtype)

    aux = jnp.zeros((8, out_pp), jnp.float32)
    aux = aux.at[0, :out_f].set(bias0)               # row 0: bias0
    aux = aux.at[1, :out_f].set(ln_w.astype(jnp.float32))   # row 1: gamma
    aux = aux.at[1, out_f:].set(1.0)
    aux = aux.at[2, :out_f].set(ln_b.astype(jnp.float32))   # row 2: beta

    return dict(w_fused=w_fused, aux=aux, in_features=int(in_f),
                out_features=int(out_f), spline_order=int(spline_order),
                tile_n=int(tile_n), n_tiles=int(n_tiles),
                out_padded=int(out_pp), matmul_dtype=matmul_dtype)


def kaln_layer_forward(x, params=None, spline_order=None, *, prepared=None,
                       tile_b=None, matmul_dtype=jnp.bfloat16, out_dtype=None):
    if prepared is None:
        # NOTE: hoist this out for repeated calls (avoids re-materializing the
        # fused weight in HBM on every forward).
        prepared = prepare_kaln_params(params, spline_order,
                                       matmul_dtype=matmul_dtype)

    w_fused = prepared["w_fused"]
    aux = prepared["aux"]
    in_f = prepared["in_features"]
    out_f = prepared["out_features"]
    order = prepared["spline_order"]
    tile_n = prepared["tile_n"]
    n_tiles = prepared["n_tiles"]
    out_pp = prepared["out_padded"]
    matmul_dtype = prepared["matmul_dtype"]
    D = order + 1

    B, in_f_x = x.shape
    assert in_f_x == in_f
    out_dtype = x.dtype if out_dtype is None else out_dtype

    # Global min/max (over the ORIGINAL batch, before padding) folded into
    # scale/offset SMEM scalars.  Guard a constant input (range == 0).
    xf = x.astype(jnp.float32)
    xmin = jnp.min(xf)
    xmax = jnp.max(xf)
    rng = xmax - xmin
    rng = jnp.where(rng > 0, rng, jnp.float32(1.0))
    scale = 2.0 / rng
    offset = -2.0 * xmin / rng - 1.0
    norm = jnp.stack([scale, offset]).astype(jnp.float32)       # (2,)

    # Batch tiling: equalized tiles; ensure >= 2 grid steps when possible so
    # the "parallel" batch axis can shard across v7x's two TensorCores.
    vmem_cap = _tpu_vmem_capacity()
    if tile_b is None:
        tile_b = 512 if vmem_cap >= (100 << 20) else 256        # 128 MiB vs 64 MiB parts
    nb = max(1, _cdiv(B, tile_b))
    if nb == 1 and B > 8:
        nb = 2
    tile_b_eff = _round_up(_cdiv(B, nb), 8)
    nb = _cdiv(B, tile_b_eff)
    b_pad = nb * tile_b_eff
    if b_pad != B:
        x = jnp.pad(x, ((0, b_pad - B), (0, 0)))

    single_buffer_w = (n_tiles == 1)
    precision = (lax.Precision.HIGHEST
                 if jnp.dtype(matmul_dtype) == jnp.float32 else None)

    kernel = functools.partial(_kaln_kernel, order, out_f, tile_n, n_tiles,
                               matmul_dtype, precision)

    # VMEM budget; only raise the scoped limit above the default, capped at
    # 3/4 of physical VMEM (leaves headroom for Mosaic internal scratch).
    mm_isz = jnp.dtype(matmul_dtype).itemsize
    out_isz = jnp.dtype(out_dtype).itemsize
    x_isz = jnp.dtype(x.dtype).itemsize
    w_bufs = 1 if single_buffer_w else 2
    budget = (2 * tile_b_eff * in_f * x_isz                 # x tile (double-buffered)
              + w_bufs * D * in_f * tile_n * mm_isz         # fused weight block(s)
              + 8 * out_pp * 4                              # aux (single-buffered)
              + 2 * tile_b_eff * out_pp * out_isz           # output tile
              + D * tile_b_eff * in_f * mm_isz              # basis scratch
              + n_tiles * tile_b_eff * tile_n * 4)          # f32 accumulator scratch
    vmem_limit = None
    need = int(budget * 1.3) + (4 << 20)
    if need > (24 << 20):
        vmem_limit = min(max(need, 32 << 20), (vmem_cap * 3) // 4)

    flops = 2 * b_pad * D * in_f * out_pp + 10 * b_pad * (D * in_f + 4 * out_pp)
    transcendentals = b_pad * (in_f + out_pp)               # sigmoid(x), sigmoid(yn)
    bytes_accessed = (b_pad * in_f * x_isz + w_fused.size * mm_isz
                      + aux.size * 4 + b_pad * out_pp * out_isz)

    out = pl.pallas_call(
        kernel,
        out_shape=jax.ShapeDtypeStruct((b_pad, out_pp), out_dtype),
        grid_spec=pltpu.PrefetchScalarGridSpec(
            num_scalar_prefetch=0,
            grid=(nb, n_tiles),
            in_specs=[
                pl.BlockSpec(memory_space=pltpu.MemorySpace.SMEM),   # [scale, offset]
                pl.BlockSpec((tile_b_eff, in_f), lambda b, j: (b, 0)),        # x tile
                _spec((D, in_f, tile_n), lambda b, j: (0, 0, j),
                      single_buffer=single_buffer_w),                         # weights
                _spec((8, out_pp), lambda b, j: (0, 0), single_buffer=True),  # bias0/LN
            ],
            out_specs=pl.BlockSpec((tile_b_eff, out_pp), lambda b, j: (b, 0)),
            scratch_shapes=[
                pltpu.VMEM((D, tile_b_eff, in_f), matmul_dtype),          # basis cache
                pltpu.VMEM((n_tiles, tile_b_eff, tile_n), jnp.float32),   # y accumulator
            ]),
        compiler_params=pltpu.CompilerParams(
            dimension_semantics=("parallel", "arbitrary"),
            vmem_limit_bytes=vmem_limit),
        cost_estimate=pl.CostEstimate(
            flops=int(flops), transcendentals=int(transcendentals),
            bytes_accessed=int(bytes_accessed)),
    )(norm, x, w_fused, aux)

    return out[:B, :out_f]


def _reference_forward(x, params, spline_order):
    """Pure-JAX reference mirroring the PyTorch KALNLayer."""
    silu = jax.nn.silu
    base_out = silu(x) @ params["base_weight"].T
    xmin, xmax = x.min(), x.max()
    xn = 2.0 * (x - xmin) / (xmax - xmin) - 1.0
    polys = [jnp.ones_like(xn)]
    if spline_order >= 1:
        polys.append(xn)
        for n in range(1, spline_order):
            polys.append(((2.0 * n + 1.0) * xn * polys[-1] - n * polys[-2]) / (n + 1.0))
    legendre = jnp.stack(polys, axis=-1).reshape(x.shape[0], -1)   # feature-major
    poly_out = legendre @ params["poly_weight"].T
    y = base_out + poly_out
    mean = y.mean(-1, keepdims=True)
    var = ((y - mean) ** 2).mean(-1, keepdims=True)
    yn = (y - mean) / jnp.sqrt(var + 1e-5)
    yn = yn * params["ln_weight"][None, :] + params["ln_bias"][None, :]
    return silu(yn)


def _kaiming_uniform(key, shape, fan_in):
    # nn.init.kaiming_uniform_(..., nonlinearity='linear'): bound = sqrt(3/fan_in)
    bound = (3.0 / fan_in) ** 0.5
    return jax.random.uniform(key, shape, jnp.float32, -bound, bound)


if __name__ == "__main__":
    in_features, out_features, spline_order = 16, 32, 3
    batch = 16
    D = spline_order + 1

    key = jax.random.PRNGKey(0)
    kx, kb, kp = jax.random.split(key, 3)

    params = {
        "base_weight": _kaiming_uniform(kb, (out_features, in_features), in_features),
        "poly_weight": _kaiming_uniform(kp, (out_features, in_features * D),
                                        in_features * D),
        "ln_weight": jnp.ones((out_features,), jnp.float32),
        "ln_bias": jnp.zeros((out_features,), jnp.float32),
    }
    x = jax.random.normal(kx, (batch, in_features), jnp.float32)

    ref = _reference_forward(x, params, spline_order)

    # f32-operand path (HIGHEST matmul precision): strict correctness gate.
    prep_f32 = prepare_kaln_params(params, spline_order, matmul_dtype=jnp.float32)
    out_f32 = jax.block_until_ready(kaln_layer_forward(x, prepared=prep_f32))
    assert out_f32.shape == (batch, out_features)
    err32 = jnp.max(jnp.abs(out_f32 - ref))
    assert jnp.allclose(out_f32, ref, rtol=1e-3, atol=1e-3), \
        f"f32 path max abs err {err32}"

    # Default fast path (bf16 MXU operands, f32 accumulation/epilogue): loose check.
    # bf16 Legendre basis loses precision for high spline orders (accuracy knob).
    prep_bf16 = prepare_kaln_params(params, spline_order)
    out_bf = jax.block_until_ready(kaln_layer_forward(x, prepared=prep_bf16))
    assert out_bf.shape == (batch, out_features)
    errbf = jnp.max(jnp.abs(out_bf - ref))
    assert jnp.allclose(out_bf, ref, rtol=5e-2, atol=1e-1), \
        f"bf16 path max abs err {errbf}"

    print("KERNEL_OK")
</pallas_src>

<mosaic_0001>
module attributes {stable_mosaic.version = 11 : i64} {
  func.func @_kaln_kernel(%arg0: i32, %arg1: i32, %arg2: memref<2xf32, #tpu.memory_space<smem>>, %arg3: memref<8x16xf32, #tpu.memory_space<vmem>>, %arg4: memref<4x16x128xf32, #tpu.memory_space<vmem>>, %arg5: memref<8x128xf32, #tpu.memory_space<vmem>>, %arg6: memref<8x128xf32, #tpu.memory_space<vmem>>, %arg7: memref<4x8x16xf32, #tpu.memory_space<vmem>>, %arg8: memref<1x8x128xf32, #tpu.memory_space<vmem>>) attributes {dimension_semantics = [#tpu.dimension_semantics<parallel>, #tpu.dimension_semantics<arbitrary>], iteration_bounds = array<i64: 2, 1>, scalar_prefetch = 0 : i64, scratch_operands = 2 : i64, tpu.core_type = #tpu.core_type<tc>, window_params = [{transform_indices = @transform_0, window_bounds = array<i64: 2>}, {transform_indices = @transform_1, window_bounds = array<i64: 8, 16>}, {pipeline_mode = #tpu.pipeline_mode<synchronous>, transform_indices = @transform_2, window_bounds = array<i64: 4, 16, 128>}, {pipeline_mode = #tpu.pipeline_mode<synchronous>, transform_indices = @transform_3, window_bounds = array<i64: 8, 128>}, {transform_indices = @transform_4, window_bounds = array<i64: 8, 128>}]} {
    %c0_i32 = arith.constant 0 : i32
    %0 = arith.cmpi eq, %arg1, %c0_i32 : i32
    %1 = arith.extui %0 : i1 to i32
    %c0_i32_0 = arith.constant 0 : i32
    %2 = arith.cmpi ne, %1, %c0_i32_0 : i32
    scf.if %2 {
      %c0_28 = arith.constant 0 : index
      %c0_29 = arith.constant 0 : index
      %33 = vector.load %arg3[%c0_28, %c0_29] : memref<8x16xf32, #tpu.memory_space<vmem>>, vector<8x16xf32>
      %34 = arith.negf %33 : vector<8x16xf32>
      %35 = math.exp %34 : vector<8x16xf32>
      %cst_30 = arith.constant 1.000000e+00 : f32
      %36 = vector.broadcast %cst_30 : f32 to vector<8x16xf32>
      %37 = arith.addf %36, %35 : vector<8x16xf32>
      %38 = arith.divf %36, %37 : vector<8x16xf32>
      %39 = arith.mulf %33, %38 : vector<8x16xf32>
      %c0_31 = arith.constant 0 : index
      %c0_32 = arith.constant 0 : index
      %c0_33 = arith.constant 0 : index
      %40 = vector.load %arg7[%c0_31, %c0_32, %c0_33] : memref<4x8x16xf32, #tpu.memory_space<vmem>>, vector<1x8x16xf32>
      %41 = vector.shape_cast %40 : vector<1x8x16xf32> to vector<8x16xf32>
      %42 = vector.shape_cast %39 : vector<8x16xf32> to vector<1x8x16xf32>
      tpu.vector_store %arg7[%c0_31, %c0_32, %c0_33], %42 {strides = array<i32>} : memref<4x8x16xf32, #tpu.memory_space<vmem>>, vector<1x8x16xf32>,
      %c0_34 = arith.constant 0 : index
      %43 = memref.load %arg2[%c0_34] : memref<2xf32, #tpu.memory_space<smem>>
      %44 = vector.broadcast %43 : f32 to vector<8x16xf32>
      %45 = arith.mulf %33, %44 : vector<8x16xf32>
      %c1_35 = arith.constant 1 : index
      %46 = memref.load %arg2[%c1_35] : memref<2xf32, #tpu.memory_space<smem>>
      %47 = vector.broadcast %46 : f32 to vector<8x16xf32>
      %48 = arith.addf %45, %47 : vector<8x16xf32>
      %c1_36 = arith.constant 1 : index
      %c0_37 = arith.constant 0 : index
      %c0_38 = arith.constant 0 : index
      %49 = vector.load %arg7[%c1_36, %c0_37, %c0_38] : memref<4x8x16xf32, #tpu.memory_space<vmem>>, vector<1x8x16xf32>
      %50 = vector.shape_cast %49 : vector<1x8x16xf32> to vector<8x16xf32>
      %51 = vector.shape_cast %48 : vector<8x16xf32> to vector<1x8x16xf32>
      tpu.vector_store %arg7[%c1_36, %c0_37, %c0_38], %51 {strides = array<i32>} : memref<4x8x16xf32, #tpu.memory_space<vmem>>, vector<1x8x16xf32>,
      %cst_39 = arith.constant 1.000000e+00 : f32
      %52 = vector.broadcast %cst_39 : f32 to vector<8x16xf32>
      %cst_40 = arith.constant 3.000000e+00 : f32
      %53 = vector.broadcast %cst_40 : f32 to vector<8x16xf32>
      %54 = arith.mulf %53, %48 : vector<8x16xf32>
      %55 = arith.mulf %54, %48 : vector<8x16xf32>
      %cst_41 = arith.constant 1.000000e+00 : f32
      %56 = vector.broadcast %cst_41 : f32 to vector<8x16xf32>
      %57 = arith.mulf %56, %52 : vector<8x16xf32>
      %58 = arith.subf %55, %57 : vector<8x16xf32>
      %cst_42 = arith.constant 2.000000e+00 : f32
      %59 = vector.broadcast %cst_42 : f32 to vector<8x16xf32>
      %60 = arith.divf %58, %59 : vector<8x16xf32>
      %c2_43 = arith.constant 2 : index
      %c0_44 = arith.constant 0 : index
      %c0_45 = arith.constant 0 : index
      %61 = vector.load %arg7[%c2_43, %c0_44, %c0_45] : memref<4x8x16xf32, #tpu.memory_space<vmem>>, vector<1x8x16xf32>
      %62 = vector.shape_cast %61 : vector<1x8x16xf32> to vector<8x16xf32>
      %63 = vector.shape_cast %60 : vector<8x16xf32> to vector<1x8x16xf32>
      tpu.vector_store %arg7[%c2_43, %c0_44, %c0_45], %63 {strides = array<i32>} : memref<4x8x16xf32, #tpu.memory_space<vmem>>, vector<1x8x16xf32>,
      %cst_46 = arith.constant 5.000000e+00 : f32
      %64 = vector.broadcast %cst_46 : f32 to vector<8x16xf32>
      %65 = arith.mulf %64, %48 : vector<8x16xf32>
      %66 = arith.mulf %65, %60 : vector<8x16xf32>
      %cst_47 = arith.constant 2.000000e+00 : f32
      %67 = vector.broadcast %cst_47 : f32 to vector<8x16xf32>
      %68 = arith.mulf %67, %48 : vector<8x16xf32>
      %69 = arith.subf %66, %68 : vector<8x16xf32>
      %cst_48 = arith.constant 3.000000e+00 : f32
      %70 = vector.broadcast %cst_48 : f32 to vector<8x16xf32>
      %71 = arith.divf %69, %70 : vector<8x16xf32>
      %c3_49 = arith.constant 3 : index
      %c0_50 = arith.constant 0 : index
      %c0_51 = arith.constant 0 : index
      %72 = vector.load %arg7[%c3_49, %c0_50, %c0_51] : memref<4x8x16xf32, #tpu.memory_space<vmem>>, vector<1x8x16xf32>
      %73 = vector.shape_cast %72 : vector<1x8x16xf32> to vector<8x16xf32>
      %74 = vector.shape_cast %71 : vector<8x16xf32> to vector<1x8x16xf32>
      tpu.vector_store %arg7[%c3_49, %c0_50, %c0_51], %74 {strides = array<i32>} : memref<4x8x16xf32, #tpu.memory_space<vmem>>, vector<1x8x16xf32>,
    } else {
    }
    %c0 = arith.constant 0 : index
    %c0_1 = arith.constant 0 : index
    %c0_2 = arith.constant 0 : index
    %3 = vector.load %arg7[%c0, %c0_1, %c0_2] : memref<4x8x16xf32, #tpu.memory_space<vmem>>, vector<1x8x16xf32>
    %4 = vector.shape_cast %3 : vector<1x8x16xf32> to vector<8x16xf32>
    %c0_3 = arith.constant 0 : index
    %c0_4 = arith.constant 0 : index
    %c0_5 = arith.constant 0 : index
    %5 = vector.load %arg4[%c0_3, %c0_4, %c0_5] : memref<4x16x128xf32, #tpu.memory_space<vmem>>, vector<1x16x128xf32>
    %6 = vector.shape_cast %5 : vector<1x16x128xf32> to vector<16x128xf32>
    %cst = arith.constant dense<0.000000e+00> : vector<8x128xf32>
    %7 = tpu.matmul %4, %6, %cst {dimension_numbers = #tpu.dot_dimension_numbers<[1], [0], [0], [1], [0, 0, 1, 1], [], []>, precision = #tpu.contract_precision<fp32>} : vector<8x16xf32>, vector<16x128xf32>, vector<8x128xf32> -> vector<8x128xf32>
    %c1 = arith.constant 1 : index
    %c0_6 = arith.constant 0 : index
    %c0_7 = arith.constant 0 : index
    %8 = vector.load %arg7[%c1, %c0_6, %c0_7] : memref<4x8x16xf32, #tpu.memory_space<vmem>>, vector<1x8x16xf32>
    %9 = vector.shape_cast %8 : vector<1x8x16xf32> to vector<8x16xf32>
    %c1_8 = arith.constant 1 : index
    %c0_9 = arith.constant 0 : index
    %c0_10 = arith.constant 0 : index
    %10 = vector.load %arg4[%c1_8, %c0_9, %c0_10] : memref<4x16x128xf32, #tpu.memory_space<vmem>>, vector<1x16x128xf32>
    %11 = vector.shape_cast %10 : vector<1x16x128xf32> to vector<16x128xf32>
    %cst_11 = arith.constant dense<0.000000e+00> : vector<8x128xf32>
    %12 = tpu.matmul %9, %11, %cst_11 {dimension_numbers = #tpu.dot_dimension_numbers<[1], [0], [0], [1], [0, 0, 1, 1], [], []>, precision = #tpu.contract_precision<fp32>} : vector<8x16xf32>, vector<16x128xf32>, vector<8x128xf32> -> vector<8x128xf32>
    %13 = arith.addf %7, %12 : vector<8x128xf32>
    %c2 = arith.constant 2 : index
    %c0_12 = arith.constant 0 : index
    %c0_13 = arith.constant 0 : index
    %14 = vector.load %arg7[%c2, %c0_12, %c0_13] : memref<4x8x16xf32, #tpu.memory_space<vmem>>, vector<1x8x16xf32>
    %15 = vector.shape_cast %14 : vector<1x8x16xf32> to vector<8x16xf32>
    %c2_14 = arith.constant 2 : index
    %c0_15 = arith.constant 0 : index
    %c0_16 = arith.constant 0 : index
    %16 = vector.load %arg4[%c2_14, %c0_15, %c0_16] : memref<4x16x128xf32, #tpu.memory_space<vmem>>, vector<1x16x128xf32>
    %17 = vector.shape_cast %16 : vector<1x16x128xf32> to vector<16x128xf32>
    %cst_17 = arith.constant dense<0.000000e+00> : vector<8x128xf32>
    %18 = tpu.matmul %15, %17, %cst_17 {dimension_numbers = #tpu.dot_dimension_numbers<[1], [0], [0], [1], [0, 0, 1, 1], [], []>, precision = #tpu.contract_precision<fp32>} : vector<8x16xf32>, vector<16x128xf32>, vector<8x128xf32> -> vector<8x128xf32>
    %19 = arith.addf %13, %18 : vector<8x128xf32>
    %c3 = arith.constant 3 : index
    %c0_18 = arith.constant 0 : index
    %c0_19 = arith.constant 0 : index
    %20 = vector.load %arg7[%c3, %c0_18, %c0_19] : memref<4x8x16xf32, #tpu.memory_space<vmem>>, vector<1x8x16xf32>
    %21 = vector.shape_cast %20 : vector<1x8x16xf32> to vector<8x16xf32>
    %c3_20 = arith.constant 3 : index
    %c0_21 = arith.constant 0 : index
    %c0_22 = arith.constant 0 : index
    %22 = vector.load %arg4[%c3_20, %c0_21, %c0_22] : memref<4x16x128xf32, #tpu.memory_space<vmem>>, vector<1x16x128xf32>
    %23 = vector.shape_cast %22 : vector<1x16x128xf32> to vector<16x128xf32>
    %cst_23 = arith.constant dense<0.000000e+00> : vector<8x128xf32>
    %24 = tpu.matmul %21, %23, %cst_23 {dimension_numbers = #tpu.dot_dimension_numbers<[1], [0], [0], [1], [0, 0, 1, 1], [], []>, precision = #tpu.contract_precision<fp32>} : vector<8x16xf32>, vector<16x128xf32>, vector<8x128xf32> -> vector<8x128xf32>
    %25 = arith.addf %19, %24 : vector<8x128xf32>
    %26 = arith.index_cast %arg1 : i32 to index
    %c0_24 = arith.constant 0 : index
    %c0_25 = arith.constant 0 : index
    %27 = vector.load %arg8[%26, %c0_24, %c0_25] : memref<1x8x128xf32, #tpu.memory_space<vmem>>, vector<1x8x128xf32>
    %28 = vector.shape_cast %27 : vector<1x8x128xf32> to vector<8x128xf32>
    %29 = vector.shape_cast %25 : vector<8x128xf32> to vector<1x8x128xf32>
    tpu.vector_store %arg8[%26, %c0_24, %c0_25], %29 {strides = array<i32>} : memref<1x8x128xf32, #tpu.memory_space<vmem>>, vector<1x8x128xf32>,
    %c0_i32_26 = arith.constant 0 : i32
    %30 = arith.cmpi eq, %arg1, %c0_i32_26 : i32
    %31 = arith.extui %30 : i1 to i32
    %c0_i32_27 = arith.constant 0 : i32
    %32 = arith.cmpi ne, %31, %c0_i32_27 : i32
    scf.if %32 {
      %cst_28 = arith.constant 0.000000e+00 : f32
      %33 = vector.broadcast %cst_28 : f32 to vector<8x1xf32>
      %cst_29 = arith.constant 0.000000e+00 : f32
      %34 = vector.broadcast %cst_29 : f32 to vector<8x1xf32>
      %c0_30 = arith.constant 0 : index
      %c0_31 = arith.constant 0 : index
      %c0_32 = arith.constant 0 : index
      %35 = vector.load %arg8[%c0_30, %c0_31, %c0_32] : memref<1x8x128xf32, #tpu.memory_space<vmem>>, vector<1x8x128xf32>
      %36 = vector.shape_cast %35 : vector<1x8x128xf32> to vector<8x128xf32>
      %c0_33 = arith.constant 0 : index
      %c0_34 = arith.constant 0 : index
      %37 = vector.load %arg5[%c0_33, %c0_34] : memref<8x128xf32, #tpu.memory_space<vmem>>, vector<1x128xf32>
      %38 = vector.broadcast %37 : vector<1x128xf32> to vector<8x128xf32>
      %39 = arith.addf %36, %38 : vector<8x128xf32>
      %cst_35 = arith.constant dense<0.000000e+00> : vector<8xf32>
      %40 = vector.multi_reduction <add>, %39, %cst_35 [1] : vector<8x128xf32> to vector<8xf32>
      %41 = vector.shape_cast %40 : vector<8xf32> to vector<8x1xf32>
      %42 = arith.addf %33, %41 : vector<8x1xf32>
      %43 = arith.mulf %39, %39 : vector<8x128xf32>
      %cst_36 = arith.constant dense<0.000000e+00> : vector<8xf32>
      %44 = vector.multi_reduction <add>, %43, %cst_36 [1] : vector<8x128xf32> to vector<8xf32>
      %45 = vector.shape_cast %44 : vector<8xf32> to vector<8x1xf32>
      %46 = arith.addf %34, %45 : vector<8x1xf32>
      %cst_37 = arith.constant 3.125000e-02 : f32
      %47 = vector.broadcast %cst_37 : f32 to vector<8x1xf32>
      %48 = arith.mulf %42, %47 : vector<8x1xf32>
      %cst_38 = arith.constant 3.125000e-02 : f32
      %49 = vector.broadcast %cst_38 : f32 to vector<8x1xf32>
      %50 = arith.mulf %46, %49 : vector<8x1xf32>
      %51 = arith.mulf %48, %48 : vector<8x1xf32>
      %52 = arith.subf %50, %51 : vector<8x1xf32>
      %cst_39 = arith.constant 0.000000e+00 : f32
      %53 = vector.broadcast %cst_39 : f32 to vector<8x1xf32>
      %54 = arith.maximumf %52, %53 : vector<8x1xf32>
      %cst_40 = arith.constant 9.99999974E-6 : f32
      %55 = vector.broadcast %cst_40 : f32 to vector<8x1xf32>
      %56 = arith.addf %54, %55 : vector<8x1xf32>
      %57 = math.rsqrt %56 : vector<8x1xf32>
      %c0_41 = arith.constant 0 : index
      %c0_42 = arith.constant 0 : index
      %c0_43 = arith.constant 0 : index
      %58 = vector.load %arg8[%c0_41, %c0_42, %c0_43] : memref<1x8x128xf32, #tpu.memory_space<vmem>>, vector<1x8x128xf32>
      %59 = vector.shape_cast %58 : vector<1x8x128xf32> to vector<8x128xf32>
      %c0_44 = arith.constant 0 : index
      %c0_45 = arith.constant 0 : index
      %60 = vector.load %arg5[%c0_44, %c0_45] : memref<8x128xf32, #tpu.memory_space<vmem>>, vector<1x128xf32>
      %61 = vector.broadcast %60 : vector<1x128xf32> to vector<8x128xf32>
      %62 = arith.addf %59, %61 : vector<8x128xf32>
      %63 = vector.broadcast %48 : vector<8x1xf32> to vector<8x128xf32>
      %64 = arith.subf %62, %63 : vector<8x128xf32>
      %65 = vector.broadcast %57 : vector<8x1xf32> to vector<8x128xf32>
      %66 = arith.mulf %64, %65 : vector<8x128xf32>
      %c1_46 = arith.constant 1 : index
      %c0_47 = arith.constant 0 : index
      %67 = vector.load %arg5[%c1_46, %c0_47] : memref<8x128xf32, #tpu.memory_space<vmem>>, vector<1x128xf32>
      %68 = vector.broadcast %67 : vector<1x128xf32> to vector<8x128xf32>
      %69 = arith.mulf %66, %68 : vector<8x128xf32>
      %c2_48 = arith.constant 2 : index
      %c0_49 = arith.constant 0 : index
      %70 = vector.load %arg5[%c2_48, %c0_49] : memref<8x128xf32, #tpu.memory_space<vmem>>, vector<1x128xf32>
      %71 = vector.broadcast %70 : vector<1x128xf32> to vector<8x128xf32>
      %72 = arith.addf %69, %71 : vector<8x128xf32>
      %73 = arith.negf %72 : vector<8x128xf32>
      %74 = math.exp %73 : vector<8x128xf32>
      %cst_50 = arith.constant 1.000000e+00 : f32
      %75 = vector.broadcast %cst_50 : f32 to vector<8x128xf32>
      %76 = arith.addf %75, %74 : vector<8x128xf32>
      %77 = arith.divf %75, %76 : vector<8x128xf32>
      %78 = arith.mulf %72, %77 : vector<8x128xf32>
      %c0_51 = arith.constant 0 : index
      %c0_52 = arith.constant 0 : index
      %79 = vector.load %arg6[%c0_51, %c0_52] : memref<8x128xf32, #tpu.memory_space<vmem>>, vector<8x128xf32>
      tpu.vector_store %arg6[%c0_51, %c0_52], %78 {strides = array<i32>} : memref<8x128xf32, #tpu.memory_space<vmem>>, vector<8x128xf32>,
    } else {
    }
    return
  }
  func.func @transform_0(%arg0: i32, %arg1: i32) -> i32 {
    %c0_i32 = arith.constant 0 : i32
    %c0_i32_0 = arith.constant 0 : i32
    return %c0_i32 : i32
  }
  func.func @transform_1(%arg0: i32, %arg1: i32) -> (i32, i32) {
    %c0_i32 = arith.constant 0 : i32
    %c0_i32_0 = arith.constant 0 : i32
    return %arg0, %c0_i32 : i32, i32
  }
  func.func @transform_2(%arg0: i32, %arg1: i32) -> (i32, i32, i32) {
    %c0_i32 = arith.constant 0 : i32
    %c0_i32_0 = arith.constant 0 : i32
    %c0_i32_1 = arith.constant 0 : i32
    return %c0_i32, %c0_i32_0, %arg1 : i32, i32, i32
  }
  func.func @transform_3(%arg0: i32, %arg1: i32) -> (i32, i32) {
    %c0_i32 = arith.constant 0 : i32
    %c0_i32_0 = arith.constant 0 : i32
    %c0_i32_1 = arith.constant 0 : i32
    return %c0_i32, %c0_i32_0 : i32, i32
  }
  func.func @transform_4(%arg0: i32, %arg1: i32) -> (i32, i32) {
    %c0_i32 = arith.constant 0 : i32
    %c0_i32_0 = arith.constant 0 : i32
    return %arg0, %c0_i32 : i32, i32
  }
}

</mosaic_0001>

<llo_original>
// kernel: tpu_custom_call.1
$region0: #{tpu_custom_call.1}
  #allocation0 [shape = 'u32[]', space=smem, size = 0x4, offset = 0x4, fixed_abs, tag = 'smem constant byte address 0x4 - core index']
  #allocation1 [shape = 'u32[72,128]{1,0:T(1,128)}', space=vmem, size = 0x9000, scoped, tag = 'internal scratch']
  #allocation2 [shape = 'f32[4,8,16]{2,1,0:T(8,128)}', space=vmem, size = 0x4000, scoped, tag = 'scratch operand']
  #allocation3 [shape = 'f32[1,8,128]{2,1,0:T(8,128)}', space=vmem, size = 0x1000, scoped, tag = 'scratch operand']
  %s0 = inlined_call_operand.hbm [shape: f32[2], index: 0, kind: input, shape index: {}]
  %s1 = inlined_call_operand.hbm [shape: f32[16,16], index: 1, kind: input, shape index: {}]
  %s2 = inlined_call_operand.hbm [shape: f32[4,16,128], index: 2, kind: input, shape index: {}]
  %s3 = inlined_call_operand.hbm [shape: f32[8,128], index: 3, kind: input, shape index: {}]
  %s4 = inlined_call_operand.hbm [shape: f32[16,128], index: 4, kind: output, shape index: {}]
  %s5 = sld [smem:[#allocation0]]
  $region73: #{tpu_custom_call.1} parent=0
    _
  %s7 = ssub.s32 1, %s5
  %s8 = scalar_select 0, %s7, %s5
  $region1: #{tpu_custom_call.1} parent=0
    #allocation4 [shape = 'u8[512]{0}', space=smem, size = 0x200, scoped, tag = 'input window, operand 0, single buffered']
    #allocation5 [shape = 's32[2]{0}', space=sflag, size = 0x8, scoped, tag = 'scoped memory for tpu_custom_call.1']
    #allocation6 [shape = 's32[2]{0}', space=sflag, size = 0x8, scoped, tag = 'scoped memory for tpu_custom_call.1']
    #allocation7 [shape = 's32[2]{0}', space=sflag, size = 0x8, scoped, tag = 'scoped memory for tpu_custom_call.1']
    #allocation8 [shape = 'u8[8192]{0}', space=vmem, size = 0x2000, scoped, tag = 'input window, operand 1']
    #allocation9 [shape = 'u8[32768]{0}', space=vmem, size = 0x8000, scoped, tag = 'input window, operand 2, single buffered']
    #allocation10 [shape = 's32[1]{0}', space=sflag, size = 0x4, scoped, tag = 'scoped memory for tpu_custom_call.1']
    #allocation11 [shape = 'u8[4096]{0}', space=vmem, size = 0x1000, scoped, tag = 'input window, operand 3, single buffered']
    #allocation12 [shape = 'u8[8192]{0}', space=vmem, size = 0x2000, scoped, tag = 'output window, operand 0']
    %9 = vsyncpa [#allocation7], 0
    %10 = vsyncpa [#allocation5], 0
    %s11 = scalar_lea.sflag [#allocation5], 1
    %12 = vsyncpa %s11, 0
    %13 = vsyncpa [#allocation10], 0
    %14 = vsyncpa [#allocation6], 0
    %s15 = scalar_lea.sflag [#allocation6], 1
    %16 = vsyncpa %s15, 0
    loop: start=0, step=1, limit=4
    $region2: #{tpu_custom_call.1} parent=1 // loop_pre_header
      _
    $region3: #{tpu_custom_call.1} parent=1 // loop_header
      %s18 = sphi 0, %s22
      %p19 = scmp.ge.s32.totalorder %s18, 4
      %s25 = sphi 0, %s37
      %s26 = sphi 0, %s33
      %s27 = sphi 0, %s25
      %s28 = sphi 0, %s26
      %s29 = sphi 0, %s27
      %s30 = sphi 0, %s28
      %s38 = sphi 0, %s38
      %s40 = sphi 0, %s38
      %s41 = sphi 0, %s40
      %s55 = sphi 0, %s41
      %s61 = sphi 0, %s63
      %s64 = sphi 0, %s61
      %s65 = sphi 0, %s64
      %s81 = sphi 0, %s65
      %s87 = sphi 0, %s89
      %s90 = sphi 0, %s87
      %s91 = sphi 0, %s90
      %s107 = sphi 0, %s91
      %s111 = sphi 0, %s111
      %s113 = sphi 0, %s111
      %s114 = sphi 0, %s113
      %s128 = sphi 0, %s114
      %s134 = sphi 0, %s136
      %s137 = sphi 0, %s134
      %s138 = sphi 0, %s137
      %s154 = sphi 0, %s138
    $region4: #{tpu_custom_call.1} parent=1 // loop_header_branch
      %21 = sbr.rel (%p19) target = $region8
    $region5: #{tpu_custom_call.1} parent=1 // loop_body
      %s23 = ssub.s32 %s18, 1
      %s24 = ssub.s32 %s18, 2
      %s31 = sadd.s32 1, %s26
      %p32 = scmp.ge.s32.totalorder %s31, 1
      %s33 = scalar_select %p32, 0, %s31
      %s34 = sadd.s32 1, %s25
      %s35 = scalar_select %p32, %s34, %s25
      %p36 = scmp.ge.s32.totalorder %s35, 2
      %s37 = scalar_select %p36, 0, %s35
      %s39 = sadd.s32 %s38, 1
      %p42 = scmp.eq.s32.totalorder %s18, 1
      %p43 = scmp.ne.s32.totalorder %s38, %s40
      %p44 = scmp.eq.s32.totalorder %s18, 0
      %p45 = por %p43, %p44
      %p46 = scmp.ne.s32.totalorder %s38, %s40
      %p47 = scmp.eq.s32.totalorder %s23, 1
      %p48 = por %p46, %p47
      %p49 = scmp.ne.s32.totalorder %s40, %s41
      %p50 = scmp.eq.s32.totalorder %s23, 0
      %p51 = por %p49, %p50
      %p52 = scmp.ne.s32.totalorder %s40, %s41
      %p53 = scmp.eq.s32.totalorder %s24, 1
      %p54 = por %p52, %p53
      %p56 = scmp.ne.s32.totalorder %s41, %s55
      %p57 = scmp.eq.s32.totalorder %s24, 0
      %p58 = por %p56, %p57
      %s59 = ssub.s32 %s25, %s37
      %p60 = scmp.eq.s32.totalorder %s59, 0
      %s62 = sadd.s32 %s61, 1
      %s63 = scalar_select %p60, %s61, %s62
      %p66 = pneg %p60
      %p67 = scmp.eq.s32.totalorder %s18, 1
      %p68 = por %p66, %p67
      %p69 = scmp.ne.s32.totalorder %s61, %s64
      %p70 = scmp.eq.s32.totalorder %s18, 0
      %p71 = por %p69, %p70
      %p72 = scmp.ne.s32.totalorder %s61, %s64
      %p73 = scmp.eq.s32.totalorder %s23, 1
      %p74 = por %p72, %p73
      %p75 = scmp.ne.s32.totalorder %s64, %s65
      %p76 = scmp.eq.s32.totalorder %s23, 0
      %p77 = por %p75, %p76
      %p78 = scmp.ne.s32.totalorder %s64, %s65
      %p79 = scmp.eq.s32.totalorder %s24, 1
      %p80 = por %p78, %p79
      %p82 = scmp.ne.s32.totalorder %s65, %s81
      %p83 = scmp.eq.s32.totalorder %s24, 0
      %p84 = por %p82, %p83
      %s85 = ssub.s32 %s26, %s33
      %p86 = scmp.eq.s32.totalorder %s85, 0
      %s88 = sadd.s32 %s87, 1
      %s89 = scalar_select %p86, %s87, %s88
      %p92 = pneg %p86
      %p93 = scmp.eq.s32.totalorder %s18, 1
      %p94 = por %p92, %p93
      %p95 = scmp.ne.s32.totalorder %s87, %s90
      %p96 = scmp.eq.s32.totalorder %s18, 0
      %p97 = por %p95, %p96
      %p98 = scmp.ne.s32.totalorder %s87, %s90
      %p99 = scmp.eq.s32.totalorder %s23, 1
      %p100 = por %p98, %p99
      %p101 = scmp.ne.s32.totalorder %s90, %s91
      %p102 = scmp.eq.s32.totalorder %s23, 0
      %p103 = por %p101, %p102
      %p104 = scmp.ne.s32.totalorder %s90, %s91
      %p105 = scmp.eq.s32.totalorder %s24, 1
      %p106 = por %p104, %p105
      %p108 = scmp.ne.s32.totalorder %s91, %s107
      %p109 = scmp.eq.s32.totalorder %s24, 0
      %p110 = por %p108, %p109
      %s112 = sadd.s32 %s111, 1
      %p115 = scmp.eq.s32.totalorder %s18, 1
      %p116 = scmp.ne.s32.totalorder %s111, %s113
      %p117 = scmp.eq.s32.totalorder %s18, 0
      %p118 = por %p116, %p117
      %p119 = scmp.ne.s32.totalorder %s111, %s113
      %p120 = scmp.eq.s32.totalorder %s23, 1
      %p121 = por %p119, %p120
      %p122 = scmp.ne.s32.totalorder %s113, %s114
      %p123 = scmp.eq.s32.totalorder %s23, 0
      %p124 = por %p122, %p123
      %p125 = scmp.ne.s32.totalorder %s113, %s114
      %p126 = scmp.eq.s32.totalorder %s24, 1
      %p127 = por %p125, %p126
      %p129 = scmp.ne.s32.totalorder %s114, %s128
      %p130 = scmp.eq.s32.totalorder %s24, 0
      %p131 = por %p129, %p130
      %s132 = ssub.s32 %s25, %s37
      %p133 = scmp.eq.s32.totalorder %s132, 0
      %s135 = sadd.s32 %s134, 1
      %s136 = scalar_select %p133, %s134, %s135
      %p139 = pneg %p133
      %p140 = scmp.eq.s32.totalorder %s18, 1
      %p141 = por %p139, %p140
      %p142 = scmp.ne.s32.totalorder %s134, %s137
      %p143 = scmp.eq.s32.totalorder %s18, 0
      %p144 = por %p142, %p143
      %p145 = scmp.ne.s32.totalorder %s134, %s137
      %p146 = scmp.eq.s32.totalorder %s23, 1
      %p147 = por %p145, %p146
      %p148 = scmp.ne.s32.totalorder %s137, %s138
      %p149 = scmp.eq.s32.totalorder %s23, 0
      %p150 = por %p148, %p149
      %p151 = scmp.ne.s32.totalorder %s137, %s138
      %p152 = scmp.eq.s32.totalorder %s24, 1
      %p153 = por %p151, %p152
      %p155 = scmp.ne.s32.totalorder %s138, %s154
      %p156 = scmp.eq.s32.totalorder %s24, 0
      %p157 = por %p155, %p156
      %p158 = scmp.le.s32.totalorder 1, %s18
      %p159 = scmp.lt.s32.totalorder %s18, 3
      %p160 = pnand %p158, %p159
      %p161 = pneg %p160
      // Predicated region
      $region9: #{tpu_custom_call.1} parent=5 // pred_check
        _
      $region10: #{tpu_custom_call.1} parent=5 // pred_check_branch
        %163 = sbr.rel (%p160) target = $region12
      $region11: #{tpu_custom_call.1} parent=5 // pred_region
        %s164 = ssub.s32 %s18, 1
        // Predicated region
        $region13: #{tpu_custom_call.1} parent=11 // pred_check
          %p165 = pneg %p51
        $region14: #{tpu_custom_call.1} parent=11 // pred_check_branch
          %167 = sbr.rel (%p165) target = $region16
        $region15: #{tpu_custom_call.1} parent=11 // pred_region
          %169 = vsyncadd [#allocation7], 0
          %s171 = sshll.u32 %s0, 4
          %s172 = int_to_ptr.hbm [resolvable:$true] %s171
          %174 = dma.hbm_to_smem %s172, 16, [#allocation4], [#allocation7]
        $region16: #{tpu_custom_call.1} parent=11 // pred_fallthru
          _
        // Predicated region
        $region17: #{tpu_custom_call.1} parent=11 // pred_check
          %p175 = pneg %p103
        $region18: #{tpu_custom_call.1} parent=11 // pred_check_branch
          %177 = sbr.rel (%p175) target = $region20
        $region19: #{tpu_custom_call.1} parent=11 // pred_region
          %179 = vsyncadd [#allocation10], 0
          %s180 = smul.addr %s28, 8
          %s181 = scalar_lea.hbm %s2, %s180
          %s182 = sshll.u32 %s181, 4
          %s183 = int_to_ptr.hbm [resolvable:$true] %s182
          %s184 = sshll.u32 [#allocation9], 4
          %s185 = int_to_ptr.vmem [resolvable:$true] %s184
          %190 = dma.hbm_to_vmem [thread:$0]  %s183, 1024, %s185, [#allocation10], 128, 128, 8
        $region20: #{tpu_custom_call.1} parent=11 // pred_fallthru
          _
        // Predicated region
        $region21: #{tpu_custom_call.1} parent=11 // pred_check
          %p191 = pneg %p124
        $region22: #{tpu_custom_call.1} parent=11 // pred_check_branch
          %193 = sbr.rel (%p191) target = $region24
        $region23: #{tpu_custom_call.1} parent=11 // pred_region
          %195 = vsyncadd [#allocation10], 0
          %s197 = sshll.u32 %s3, 4
          %s198 = int_to_ptr.hbm [resolvable:$true] %s197
          %s199 = sshll.u32 [#allocation11], 4
          %s200 = int_to_ptr.vmem [resolvable:$true] %s199
          %202 = dma.hbm_to_vmem [thread:$0]  %s198, 128, %s200, [#allocation10]
        $region24: #{tpu_custom_call.1} parent=11 // pred_fallthru
          _
      $region12: #{tpu_custom_call.1} parent=5 // pred_fallthru
        _
      %p203 = scmp.lt.s32.totalorder %s18, 2
      // Predicated region
      $region25: #{tpu_custom_call.1} parent=5 // pred_check
        %p204 = pneg %p203
      $region26: #{tpu_custom_call.1} parent=5 // pred_check_branch
        %206 = sbr.rel (%p204) target = $region28
      $region27: #{tpu_custom_call.1} parent=5 // pred_region
        // Predicated region
        $region29: #{tpu_custom_call.1} parent=27 // pred_check
          %p207 = pneg %p71
        $region30: #{tpu_custom_call.1} parent=27 // pred_check_branch
          %209 = sbr.rel (%p207) target = $region32
        $region31: #{tpu_custom_call.1} parent=27 // pred_region
          %s210 = sand.u32 %s61, 1
          %s211 = scalar_lea.sflag [#allocation5], %s210
          %s212 = sand.u32 %s61, 1
          %s213 = smul.addr %s212, 8
          %s214 = scalar_lea.vmem [#allocation8], %s213
          %216 = vsyncadd %s211, 0
          %s217 = smul.addr %s25, 8
          %s218 = scalar_lea.hbm %s1, %s217
          %s220 = sshll.u32 %s218, 4
          %s221 = int_to_ptr.hbm [resolvable:$true] %s220
          %s222 = sshll.u32 %s214, 4
          %s223 = int_to_ptr.vmem [resolvable:$true] %s222
          %225 = dma.hbm_to_vmem [thread:$0]  %s221, 128, %s223, %s211
        $region32: #{tpu_custom_call.1} parent=27 // pred_fallthru
          _
      $region28: #{tpu_custom_call.1} parent=5 // pred_fallthru
        _
      %p226 = scmp.le.s32.totalorder 1, %s18
      %p227 = scmp.lt.s32.totalorder %s18, 3
      %p228 = pnand %p226, %p227
      %p229 = pneg %p228
      // Predicated region
      $region33: #{tpu_custom_call.1} parent=5 // pred_check
        _
      $region34: #{tpu_custom_call.1} parent=5 // pred_check_branch
        %231 = sbr.rel (%p228) target = $region36
      $region35: #{tpu_custom_call.1} parent=5 // pred_region
        %s232 = ssub.s32 %s18, 1
        // Predicated region
        $region37: #{tpu_custom_call.1} parent=35 // pred_check
          %p233 = pneg %p51
        $region38: #{tpu_custom_call.1} parent=35 // pred_check_branch
          %235 = sbr.rel (%p233) target = $region40
        $region39: #{tpu_custom_call.1} parent=35 // pred_region
          %237 = dma.done [#allocation7], 16
        $region40: #{tpu_custom_call.1} parent=35 // pred_fallthru
          _
        %s238 = sand.u32 %s64, 1
        %s239 = scalar_lea.sflag [#allocation5], %s238
        %s240 = sand.u32 %s64, 1
        %s241 = smul.addr %s240, 8
        %s242 = scalar_lea.vmem [#allocation8], %s241
        // Predicated region
        $region41: #{tpu_custom_call.1} parent=35 // pred_check
          %p243 = pneg %p77
        $region42: #{tpu_custom_call.1} parent=35 // pred_check_branch
          %245 = sbr.rel (%p243) target = $region44
        $region43: #{tpu_custom_call.1} parent=35 // pred_region
          %247 = dma.done %s239, 128
        $region44: #{tpu_custom_call.1} parent=35 // pred_fallthru
          _
        // Predicated region
        $region45: #{tpu_custom_call.1} parent=35 // pred_check
          %p248 = pneg %p103
        $region46: #{tpu_custom_call.1} parent=35 // pred_check_branch
          %250 = sbr.rel (%p248) target = $region48
        $region47: #{tpu_custom_call.1} parent=35 // pred_region
          %252 = dma.done [#allocation10], 1024
        $region48: #{tpu_custom_call.1} parent=35 // pred_fallthru
          _
        // Predicated region
        $region49: #{tpu_custom_call.1} parent=35 // pred_check
          %p253 = pneg %p124
        $region50: #{tpu_custom_call.1} parent=35 // pred_check_branch
          %255 = sbr.rel (%p253) target = $region52
        $region51: #{tpu_custom_call.1} parent=35 // pred_region
          %257 = dma.done [#allocation10], 128
        $region52: #{tpu_custom_call.1} parent=35 // pred_fallthru
          _
        %258 = sfence
        %p259 = pneg %p51
        %p260 = pneg %p48
        %s261 = sand.u32 %s64, 1
        %s262 = scalar_lea.sflag [#allocation5], %s261
        %s263 = sand.u32 %s64, 1
        %s264 = smul.addr %s263, 8
        %s265 = scalar_lea.vmem [#allocation8], %s264
        %p266 = pneg %p77
        %p267 = pneg %p74
        %p268 = pneg %p103
        %p269 = pneg %p100
        %p270 = pneg %p124
        %p271 = pneg %p121
        %p272 = pneg %p150
        %p273 = pneg %p147
        %s274 = sand.u32 %s137, 1
        %s275 = scalar_lea.sflag [#allocation6], %s274
        %s276 = sand.u32 %s137, 1
        %s277 = smul.addr %s276, 8
        %s278 = scalar_lea.vmem [#allocation12], %s277
        %p279 = scmp.eq.s32.totalorder %s28, 0
        // Predicated region
        $region53: #{tpu_custom_call.1} parent=35 // pred_check
          %p280 = pneg %p279
        $region54: #{tpu_custom_call.1} parent=35 // pred_check_branch
          %282 = sbr.rel (%p280) target = $region56
        $region55: #{tpu_custom_call.1} parent=35 // pred_region
          %v283 = vld [vmem:[%s242] sm:$0xff]
          %v284 = vxor.u32 %v283, 2147483648
          %v285 = vmul.f32 %v284, 1.442695
          %v286 = vpow.pop %v285
          %v287 = vadd.f32 %v286, 1.0
          %v288 = vrcp.pop %v287
          %v289 = vmul.f32 %v287, %v288
          %v290 = vsub.f32 1.0, %v289
          %v291 = vmul.f32 %v288, %v290
          %v292 = vadd.f32 %v288, %v291
          %vm293 = vweird.f32 %v287
          %vm294 = vweird.f32 %v288
          %vm295 = vmor %vm293, %vm294
          %v296 = vsel %vm295, %v288, %v292
          %v297 = vand.u32 2147483647, %v287
          %vm298 = vcmp.eq.f32.partialorder %v297, 8.507059e+37
          %v299 = vand.u32 %v287, 2147483648
          %v300 = vor.u32 1.1754944e-38, %v299
          %v301 = vsel %vm298, %v300, %v296
          %v302 = vmul.f32 1.0, %v301
          %v303 = vmul.f32 %v283, %v302
          %vm304 = vcmask 130048
          %305 = vst.msk [vmem:[#allocation2] sm:$0xff] %vm304, %v303
          %s306 = sld [smem:[#allocation4]]
          %v307 = vstv %s306
          %v308 = vmul.f32 %v283, %v307
          %s309 = sld [smem:[#allocation4 + $0x1]]
          %v310 = vstv %s309
          %v311 = vadd.f32 %v308, %v310
          %s312 = scalar_lea.vmem [#allocation2], 8
          %313 = vst.msk [vmem:[%s312] sm:$0xff] %vm304, %v311
          %v314 = vmul.f32 %v311, 3.0
          %v315 = vmul.f32 %v314, %v311
          %v316 = vsub.f32 %v315, 1.0
          %v317 = vrcp.pop 2.0
          %v318 = vmul.f32 2.0, %v317
          %v319 = vsub.f32 1.0, %v318
          %v320 = vmul.f32 %v317, %v319
          %v321 = vadd.f32 %v317, %v320
          %vm322 = vweird.f32 %v317
          %v323 = vsel %vm322, %v317, %v321
          %v324 = vmul.f32 %v316, %v323
          %s325 = scalar_lea.vmem [#allocation2], 16
          %326 = vst.msk [vmem:[%s325] sm:$0xff] %vm304, %v324
          %v327 = vmul.f32 %v311, 5.0
          %v328 = vmul.f32 %v327, %v324
          %v329 = vmul.f32 %v311, 2.0
          %v330 = vsub.f32 %v328, %v329
          %v331 = vrcp.pop 3.0
          %v332 = vmul.f32 3.0, %v331
          %v333 = vsub.f32 1.0, %v332
          %v334 = vmul.f32 %v331, %v333
          %v335 = vadd.f32 %v331, %v334
          %vm336 = vweird.f32 %v331
          %v337 = vsel %vm336, %v331, %v335
          %v338 = vmul.f32 %v330, %v337
          %s339 = scalar_lea.vmem [#allocation2], 24
          %340 = vst.msk [vmem:[%s339] sm:$0xff] %vm304, %v338
        $region56: #{tpu_custom_call.1} parent=35 // pred_fallthru
          _
        %v341 = vld [vmem:[#allocation2] sm:$0xff]
        %v342 = vld [vmem:[#allocation9] sm:$0xff]
        %v343 = vld [vmem:[#allocation9 + $0x8] sm:$0xff]
        %s344 = scalar_lea.vmem [#allocation2], 8
        %v345 = vld [vmem:[%s344] sm:$0xff]
        %s346 = scalar_lea.vmem [#allocation9], 16
        %v347 = vld [vmem:[%s346] sm:$0xff]
        %v348 = vld [vmem:[%s346 + $0x8] sm:$0xff]
        %vm349 = vcmask 130048
        %v351 = vsel %vm349, %v345, 0
        %353 = vmatpush.msra.mxu0 0.0
        %354 = vmatpush.msra.mxu0 0.0
        %355 = vmatpush.msra.mxu0 0.0
        %356 = vmatpush.msra.mxu0 0.0
        %357 = vmatpush.msra.mxu0 0.0
        %358 = vmatpush.msra.mxu0 0.0
        %359 = vmatpush.msra.mxu0 0.0
        %360 = vmatpush.msra.mxu0 0.0
        %361 = vmatpush.msra.mxu0 0.0
        %362 = vmatpush.msra.mxu0 0.0
        %363 = vmatpush.msra.mxu0 0.0
        %364 = vmatpush.msra.mxu0 0.0
        %365 = vmatpush.msra.mxu0 0.0
        %366 = vmatpush.msra.mxu0 0.0
        %v367 = vand.u32 %v348, 4294901760
        %368 = vmatpush.msra.mxu0 %v367
        %v369 = vand.u32 %v347, 4294901760
        %370 = vmatpush.msra.mxu0 %v369
        %v371 = vand.u32 %v351, 4294901760
        %v372 = vsub.f32 %v351, %v371
        %v373 = vand.u32 %v372, 4294901760
        %v374 = vsub.f32 %v372, %v373
        %v375 = vand.u32 %v374, 4294901760
        %376 = vmatmul.f32.gmra.mxu0 %v375
        %v377 = vpop.f32.mrf.mxu0
        %v378 = vadd.f32 0.0, %v377
        %379 = vdwg.mxu0
        %380 = vmatpush.msra.mxu0 0.0
        %381 = vmatpush.msra.mxu0 0.0
        %382 = vmatpush.msra.mxu0 0.0
        %383 = vmatpush.msra.mxu0 0.0
        %384 = vmatpush.msra.mxu0 0.0
        %385 = vmatpush.msra.mxu0 0.0
        %386 = vmatpush.msra.mxu0 0.0
        %387 = vmatpush.msra.mxu0 0.0
        %388 = vmatpush.msra.mxu0 0.0
        %389 = vmatpush.msra.mxu0 0.0
        %390 = vmatpush.msra.mxu0 0.0
        %391 = vmatpush.msra.mxu0 0.0
        %392 = vmatpush.msra.mxu0 0.0
        %393 = vmatpush.msra.mxu0 0.0
        %v394 = vand.u32 %v348, 4294901760
        %v395 = vsub.f32 %v348, %v394
        %v396 = vand.u32 %v395, 4294901760
        %v397 = vsub.f32 %v395, %v396
        %v398 = vand.u32 %v397, 4294901760
        %399 = vmatpush.msra.mxu0 %v398
        %v400 = vand.u32 %v347, 4294901760
        %v401 = vsub.f32 %v347, %v400
        %v402 = vand.u32 %v401, 4294901760
        %v403 = vsub.f32 %v401, %v402
        %v404 = vand.u32 %v403, 4294901760
        %405 = vmatpush.msra.mxu0 %v404
        %v406 = vand.u32 %v351, 4294901760
        %407 = vmatmul.f32.gmra.mxu0 %v406
        %v408 = vpop.f32.mrf.mxu0
        %v409 = vadd.f32 %v378, %v408
        %410 = vdwg.mxu0
        %411 = vmatpush.msra.mxu0 0.0
        %412 = vmatpush.msra.mxu0 0.0
        %413 = vmatpush.msra.mxu0 0.0
        %414 = vmatpush.msra.mxu0 0.0
        %415 = vmatpush.msra.mxu0 0.0
        %416 = vmatpush.msra.mxu0 0.0
        %417 = vmatpush.msra.mxu0 0.0
        %418 = vmatpush.msra.mxu0 0.0
        %419 = vmatpush.msra.mxu0 0.0
        %420 = vmatpush.msra.mxu0 0.0
        %421 = vmatpush.msra.mxu0 0.0
        %422 = vmatpush.msra.mxu0 0.0
        %423 = vmatpush.msra.mxu0 0.0
        %424 = vmatpush.msra.mxu0 0.0
        %v425 = vand.u32 %v348, 4294901760
        %v426 = vsub.f32 %v348, %v425
        %427 = vmatpush.msra.mxu0 %v426
        %v428 = vand.u32 %v347, 4294901760
        %v429 = vsub.f32 %v347, %v428
        %430 = vmatpush.msra.mxu0 %v429
        %v431 = vand.u32 %v351, 4294901760
        %v432 = vsub.f32 %v351, %v431
        %433 = vmatmul.f32.gmra.mxu0 %v432
        %v434 = vpop.f32.mrf.mxu0
        %v435 = vadd.f32 %v409, %v434
        %436 = vdwg.mxu0
        %437 = vmatpush.msra.mxu0 0.0
        %438 = vmatpush.msra.mxu0 0.0
        %439 = vmatpush.msra.mxu0 0.0
        %440 = vmatpush.msra.mxu0 0.0
        %441 = vmatpush.msra.mxu0 0.0
        %442 = vmatpush.msra.mxu0 0.0
        %443 = vmatpush.msra.mxu0 0.0
        %444 = vmatpush.msra.mxu0 0.0
        %445 = vmatpush.msra.mxu0 0.0
        %446 = vmatpush.msra.mxu0 0.0
        %447 = vmatpush.msra.mxu0 0.0
        %448 = vmatpush.msra.mxu0 0.0
        %449 = vmatpush.msra.mxu0 0.0
        %450 = vmatpush.msra.mxu0 0.0
        %v451 = vand.u32 %v348, 4294901760
        %452 = vmatpush.msra.mxu0 %v451
        %v453 = vand.u32 %v347, 4294901760
        %454 = vmatpush.msra.mxu0 %v453
        %v455 = vand.u32 %v351, 4294901760
        %v456 = vsub.f32 %v351, %v455
        %v457 = vand.u32 %v456, 4294901760
        %458 = vmatmul.f32.gmra.mxu0 %v457
        %v459 = vpop.f32.mrf.mxu0
        %v460 = vadd.f32 %v435, %v459
        %461 = vdwg.mxu0
        %462 = vmatpush.msra.mxu0 0.0
        %463 = vmatpush.msra.mxu0 0.0
        %464 = vmatpush.msra.mxu0 0.0
        %465 = vmatpush.msra.mxu0 0.0
        %466 = vmatpush.msra.mxu0 0.0
        %467 = vmatpush.msra.mxu0 0.0
        %468 = vmatpush.msra.mxu0 0.0
        %469 = vmatpush.msra.mxu0 0.0
        %470 = vmatpush.msra.mxu0 0.0
        %471 = vmatpush.msra.mxu0 0.0
        %472 = vmatpush.msra.mxu0 0.0
        %473 = vmatpush.msra.mxu0 0.0
        %474 = vmatpush.msra.mxu0 0.0
        %475 = vmatpush.msra.mxu0 0.0
        %v476 = vand.u32 %v348, 4294901760
        %v477 = vsub.f32 %v348, %v476
        %v478 = vand.u32 %v477, 4294901760
        %479 = vmatpush.msra.mxu0 %v478
        %v480 = vand.u32 %v347, 4294901760
        %v481 = vsub.f32 %v347, %v480
        %v482 = vand.u32 %v481, 4294901760
        %483 = vmatpush.msra.mxu0 %v482
        %v484 = vand.u32 %v351, 4294901760
        %485 = vmatmul.f32.gmra.mxu0 %v484
        %v486 = vpop.f32.mrf.mxu0
        %v487 = vadd.f32 %v460, %v486
        %488 = vdwg.mxu0
        %489 = vmatpush.msra.mxu0 0.0
        %490 = vmatpush.msra.mxu0 0.0
        %491 = vmatpush.msra.mxu0 0.0
        %492 = vmatpush.msra.mxu0 0.0
        %493 = vmatpush.msra.mxu0 0.0
        %494 = vmatpush.msra.mxu0 0.0
        %495 = vmatpush.msra.mxu0 0.0
        %496 = vmatpush.msra.mxu0 0.0
        %497 = vmatpush.msra.mxu0 0.0
        %498 = vmatpush.msra.mxu0 0.0
        %499 = vmatpush.msra.mxu0 0.0
        %500 = vmatpush.msra.mxu0 0.0
        %501 = vmatpush.msra.mxu0 0.0
        %502 = vmatpush.msra.mxu0 0.0
        %v503 = vand.u32 %v348, 4294901760
        %504 = vmatpush.msra.mxu0 %v503
        %v505 = vand.u32 %v347, 4294901760
        %506 = vmatpush.msra.mxu0 %v505
        %v507 = vand.u32 %v351, 4294901760
        %508 = vmatmul.f32.gmra.mxu0 %v507
        %v509 = vpop.f32.mrf.mxu0
        %v510 = vadd.f32 %v487, %v509
        %511 = vdwg.mxu0
        %v513 = vsel %vm349, %v341, 0
        %515 = vmatpush.msra.mxu0 0.0
        %516 = vmatpush.msra.mxu0 0.0
        %517 = vmatpush.msra.mxu0 0.0
        %518 = vmatpush.msra.mxu0 0.0
        %519 = vmatpush.msra.mxu0 0.0
        %520 = vmatpush.msra.mxu0 0.0
        %521 = vmatpush.msra.mxu0 0.0
        %522 = vmatpush.msra.mxu0 0.0
        %523 = vmatpush.msra.mxu0 0.0
        %524 = vmatpush.msra.mxu0 0.0
        %525 = vmatpush.msra.mxu0 0.0
        %526 = vmatpush.msra.mxu0 0.0
        %527 = vmatpush.msra.mxu0 0.0
        %528 = vmatpush.msra.mxu0 0.0
        %v529 = vand.u32 %v343, 4294901760
        %530 = vmatpush.msra.mxu0 %v529
        %v531 = vand.u32 %v342, 4294901760
        %532 = vmatpush.msra.mxu0 %v531
        %v533 = vand.u32 %v513, 4294901760
        %v534 = vsub.f32 %v513, %v533
        %v535 = vand.u32 %v534, 4294901760
        %v536 = vsub.f32 %v534, %v535
        %v537 = vand.u32 %v536, 4294901760
        %538 = vmatmul.f32.gmra.mxu0 %v537
        %v539 = vpop.f32.mrf.mxu0
        %v540 = vadd.f32 %v510, %v539
        %541 = vdwg.mxu0
        %542 = vmatpush.msra.mxu0 0.0
        %543 = vmatpush.msra.mxu0 0.0
        %544 = vmatpush.msra.mxu0 0.0
        %545 = vmatpush.msra.mxu0 0.0
        %546 = vmatpush.msra.mxu0 0.0
        %547 = vmatpush.msra.mxu0 0.0
        %548 = vmatpush.msra.mxu0 0.0
        %549 = vmatpush.msra.mxu0 0.0
        %550 = vmatpush.msra.mxu0 0.0
        %551 = vmatpush.msra.mxu0 0.0
        %552 = vmatpush.msra.mxu0 0.0
        %553 = vmatpush.msra.mxu0 0.0
        %554 = vmatpush.msra.mxu0 0.0
        %555 = vmatpush.msra.mxu0 0.0
        %v556 = vand.u32 %v343, 4294901760
        %v557 = vsub.f32 %v343, %v556
        %v558 = vand.u32 %v557, 4294901760
        %v559 = vsub.f32 %v557, %v558
        %v560 = vand.u32 %v559, 4294901760
        %561 = vmatpush.msra.mxu0 %v560
        %v562 = vand.u32 %v342, 4294901760
        %v563 = vsub.f32 %v342, %v562
        %v564 = vand.u32 %v563, 4294901760
        %v565 = vsub.f32 %v563, %v564
        %v566 = vand.u32 %v565, 4294901760
        %567 = vmatpush.msra.mxu0 %v566
        %v568 = vand.u32 %v513, 4294901760
        %569 = vmatmul.f32.gmra.mxu0 %v568
        %v570 = vpop.f32.mrf.mxu0
        %v571 = vadd.f32 %v540, %v570
        %572 = vdwg.mxu0
        %573 = vmatpush.msra.mxu0 0.0
        %574 = vmatpush.msra.mxu0 0.0
        %575 = vmatpush.msra.mxu0 0.0
        %576 = vmatpush.msra.mxu0 0.0
        %577 = vmatpush.msra.mxu0 0.0
        %578 = vmatpush.msra.mxu0 0.0
        %579 = vmatpush.msra.mxu0 0.0
        %580 = vmatpush.msra.mxu0 0.0
        %581 = vmatpush.msra.mxu0 0.0
        %582 = vmatpush.msra.mxu0 0.0
        %583 = vmatpush.msra.mxu0 0.0
        %584 = vmatpush.msra.mxu0 0.0
        %585 = vmatpush.msra.mxu0 0.0
        %586 = vmatpush.msra.mxu0 0.0
        %v587 = vand.u32 %v343, 4294901760
        %v588 = vsub.f32 %v343, %v587
        %589 = vmatpush.msra.mxu0 %v588
        %v590 = vand.u32 %v342, 4294901760
        %v591 = vsub.f32 %v342, %v590
        %592 = vmatpush.msra.mxu0 %v591
        %v593 = vand.u32 %v513, 4294901760
        %v594 = vsub.f32 %v513, %v593
        %595 = vmatmul.f32.gmra.mxu0 %v594
        %v596 = vpop.f32.mrf.mxu0
        %v597 = vadd.f32 %v571, %v596
        %598 = vdwg.mxu0
        %599 = vmatpush.msra.mxu0 0.0
        %600 = vmatpush.msra.mxu0 0.0
        %601 = vmatpush.msra.mxu0 0.0
        %602 = vmatpush.msra.mxu0 0.0
        %603 = vmatpush.msra.mxu0 0.0
        %604 = vmatpush.msra.mxu0 0.0
        %605 = vmatpush.msra.mxu0 0.0
        %606 = vmatpush.msra.mxu0 0.0
        %607 = vmatpush.msra.mxu0 0.0
        %608 = vmatpush.msra.mxu0 0.0
        %609 = vmatpush.msra.mxu0 0.0
        %610 = vmatpush.msra.mxu0 0.0
        %611 = vmatpush.msra.mxu0 0.0
        %612 = vmatpush.msra.mxu0 0.0
        %v613 = vand.u32 %v343, 4294901760
        %614 = vmatpush.msra.mxu0 %v613
        %v615 = vand.u32 %v342, 4294901760
        %616 = vmatpush.msra.mxu0 %v615
        %v617 = vand.u32 %v513, 4294901760
        %v618 = vsub.f32 %v513, %v617
        %v619 = vand.u32 %v618, 4294901760
        %620 = vmatmul.f32.gmra.mxu0 %v619
        %v621 = vpop.f32.mrf.mxu0
        %v622 = vadd.f32 %v597, %v621
        %623 = vdwg.mxu0
        %624 = vmatpush.msra.mxu0 0.0
        %625 = vmatpush.msra.mxu0 0.0
        %626 = vmatpush.msra.mxu0 0.0
        %627 = vmatpush.msra.mxu0 0.0
        %628 = vmatpush.msra.mxu0 0.0
        %629 = vmatpush.msra.mxu0 0.0
        %630 = vmatpush.msra.mxu0 0.0
        %631 = vmatpush.msra.mxu0 0.0
        %632 = vmatpush.msra.mxu0 0.0
        %633 = vmatpush.msra.mxu0 0.0
        %634 = vmatpush.msra.mxu0 0.0
        %635 = vmatpush.msra.mxu0 0.0
        %636 = vmatpush.msra.mxu0 0.0
        %637 = vmatpush.msra.mxu0 0.0
        %v638 = vand.u32 %v343, 4294901760
        %v639 = vsub.f32 %v343, %v638
        %v640 = vand.u32 %v639, 4294901760
        %641 = vmatpush.msra.mxu0 %v640
        %v642 = vand.u32 %v342, 4294901760
        %v643 = vsub.f32 %v342, %v642
        %v644 = vand.u32 %v643, 4294901760
        %645 = vmatpush.msra.mxu0 %v644
        %v646 = vand.u32 %v513, 4294901760
        %647 = vmatmul.f32.gmra.mxu0 %v646
        %v648 = vpop.f32.mrf.mxu0
        %v649 = vadd.f32 %v622, %v648
        %650 = vdwg.mxu0
        %651 = vmatpush.msra.mxu0 0.0
        %652 = vmatpush.msra.mxu0 0.0
        %653 = vmatpush.msra.mxu0 0.0
        %654 = vmatpush.msra.mxu0 0.0
        %655 = vmatpush.msra.mxu0 0.0
        %656 = vmatpush.msra.mxu0 0.0
        %657 = vmatpush.msra.mxu0 0.0
        %658 = vmatpush.msra.mxu0 0.0
        %659 = vmatpush.msra.mxu0 0.0
        %660 = vmatpush.msra.mxu0 0.0
        %661 = vmatpush.msra.mxu0 0.0
        %662 = vmatpush.msra.mxu0 0.0
        %663 = vmatpush.msra.mxu0 0.0
        %664 = vmatpush.msra.mxu0 0.0
        %v665 = vand.u32 %v343, 4294901760
        %666 = vmatpush.msra.mxu0 %v665
        %v667 = vand.u32 %v342, 4294901760
        %668 = vmatpush.msra.mxu0 %v667
        %v669 = vand.u32 %v513, 4294901760
        %670 = vmatmul.f32.gmra.mxu0 %v669
        %v671 = vpop.f32.mrf.mxu0
        %v672 = vadd.f32 %v649, %v671
        %673 = vdwg.mxu0
        %s674 = scalar_lea.vmem [#allocation2], 16
        %v675 = vld [vmem:[%s674] sm:$0xff]
        %s676 = scalar_lea.vmem [#allocation9], 32
        %v677 = vld [vmem:[%s676] sm:$0xff]
        %v678 = vld [vmem:[%s676 + $0x8] sm:$0xff]
        %v680 = vsel %vm349, %v675, 0
        %682 = vmatpush.msra.mxu0 0.0
        %683 = vmatpush.msra.mxu0 0.0
        %684 = vmatpush.msra.mxu0 0.0
        %685 = vmatpush.msra.mxu0 0.0
        %686 = vmatpush.msra.mxu0 0.0
        %687 = vmatpush.msra.mxu0 0.0
        %688 = vmatpush.msra.mxu0 0.0
        %689 = vmatpush.msra.mxu0 0.0
        %690 = vmatpush.msra.mxu0 0.0
        %691 = vmatpush.msra.mxu0 0.0
        %692 = vmatpush.msra.mxu0 0.0
        %693 = vmatpush.msra.mxu0 0.0
        %694 = vmatpush.msra.mxu0 0.0
        %695 = vmatpush.msra.mxu0 0.0
        %v696 = vand.u32 %v678, 4294901760
        %697 = vmatpush.msra.mxu0 %v696
        %v698 = vand.u32 %v677, 4294901760
        %699 = vmatpush.msra.mxu0 %v698
        %v700 = vand.u32 %v680, 4294901760
        %v701 = vsub.f32 %v680, %v700
        %v702 = vand.u32 %v701, 4294901760
        %v703 = vsub.f32 %v701, %v702
        %v704 = vand.u32 %v703, 4294901760
        %705 = vmatmul.f32.gmra.mxu0 %v704
        %v706 = vpop.f32.mrf.mxu0
        %v707 = vadd.f32 0.0, %v706
        %708 = vdwg.mxu0
        %709 = vmatpush.msra.mxu0 0.0
        %710 = vmatpush.msra.mxu0 0.0
        %711 = vmatpush.msra.mxu0 0.0
        %712 = vmatpush.msra.mxu0 0.0
        %713 = vmatpush.msra.mxu0 0.0
        %714 = vmatpush.msra.mxu0 0.0
        %715 = vmatpush.msra.mxu0 0.0
        %716 = vmatpush.msra.mxu0 0.0
        %717 = vmatpush.msra.mxu0 0.0
        %718 = vmatpush.msra.mxu0 0.0
        %719 = vmatpush.msra.mxu0 0.0
        %720 = vmatpush.msra.mxu0 0.0
        %721 = vmatpush.msra.mxu0 0.0
        %722 = vmatpush.msra.mxu0 0.0
        %v723 = vand.u32 %v678, 4294901760
        %v724 = vsub.f32 %v678, %v723
        %v725 = vand.u32 %v724, 4294901760
        %v726 = vsub.f32 %v724, %v725
        %v727 = vand.u32 %v726, 4294901760
        %728 = vmatpush.msra.mxu0 %v727
        %v729 = vand.u32 %v677, 4294901760
        %v730 = vsub.f32 %v677, %v729
        %v731 = vand.u32 %v730, 4294901760
        %v732 = vsub.f32 %v730, %v731
        %v733 = vand.u32 %v732, 4294901760
        %734 = vmatpush.msra.mxu0 %v733
        %v735 = vand.u32 %v680, 4294901760
        %736 = vmatmul.f32.gmra.mxu0 %v735
        %v737 = vpop.f32.mrf.mxu0
        %v738 = vadd.f32 %v707, %v737
        %739 = vdwg.mxu0
        %740 = vmatpush.msra.mxu0 0.0
        %741 = vmatpush.msra.mxu0 0.0
        %742 = vmatpush.msra.mxu0 0.0
        %743 = vmatpush.msra.mxu0 0.0
        %744 = vmatpush.msra.mxu0 0.0
        %745 = vmatpush.msra.mxu0 0.0
        %746 = vmatpush.msra.mxu0 0.0
        %747 = vmatpush.msra.mxu0 0.0
        %748 = vmatpush.msra.mxu0 0.0
        %749 = vmatpush.msra.mxu0 0.0
        %750 = vmatpush.msra.mxu0 0.0
        %751 = vmatpush.msra.mxu0 0.0
        %752 = vmatpush.msra.mxu0 0.0
        %753 = vmatpush.msra.mxu0 0.0
        %v754 = vand.u32 %v678, 4294901760
        %v755 = vsub.f32 %v678, %v754
        %756 = vmatpush.msra.mxu0 %v755
        %v757 = vand.u32 %v677, 4294901760
        %v758 = vsub.f32 %v677, %v757
        %759 = vmatpush.msra.mxu0 %v758
        %v760 = vand.u32 %v680, 4294901760
        %v761 = vsub.f32 %v680, %v760
        %762 = vmatmul.f32.gmra.mxu0 %v761
        %v763 = vpop.f32.mrf.mxu0
        %v764 = vadd.f32 %v738, %v763
        %765 = vdwg.mxu0
        %766 = vmatpush.msra.mxu0 0.0
        %767 = vmatpush.msra.mxu0 0.0
        %768 = vmatpush.msra.mxu0 0.0
        %769 = vmatpush.msra.mxu0 0.0
        %770 = vmatpush.msra.mxu0 0.0
        %771 = vmatpush.msra.mxu0 0.0
        %772 = vmatpush.msra.mxu0 0.0
        %773 = vmatpush.msra.mxu0 0.0
        %774 = vmatpush.msra.mxu0 0.0
        %775 = vmatpush.msra.mxu0 0.0
        %776 = vmatpush.msra.mxu0 0.0
        %777 = vmatpush.msra.mxu0 0.0
        %778 = vmatpush.msra.mxu0 0.0
        %779 = vmatpush.msra.mxu0 0.0
        %v780 = vand.u32 %v678, 4294901760
        %781 = vmatpush.msra.mxu0 %v780
        %v782 = vand.u32 %v677, 4294901760
        %783 = vmatpush.msra.mxu0 %v782
        %v784 = vand.u32 %v680, 4294901760
        %v785 = vsub.f32 %v680, %v784
        %v786 = vand.u32 %v785, 4294901760
        %787 = vmatmul.f32.gmra.mxu0 %v786
        %v788 = vpop.f32.mrf.mxu0
        %v789 = vadd.f32 %v764, %v788
        %790 = vdwg.mxu0
        %791 = vmatpush.msra.mxu0 0.0
        %792 = vmatpush.msra.mxu0 0.0
        %793 = vmatpush.msra.mxu0 0.0
        %794 = vmatpush.msra.mxu0 0.0
        %795 = vmatpush.msra.mxu0 0.0
        %796 = vmatpush.msra.mxu0 0.0
        %797 = vmatpush.msra.mxu0 0.0
        %798 = vmatpush.msra.mxu0 0.0
        %799 = vmatpush.msra.mxu0 0.0
        %800 = vmatpush.msra.mxu0 0.0
        %801 = vmatpush.msra.mxu0 0.0
        %802 = vmatpush.msra.mxu0 0.0
        %803 = vmatpush.msra.mxu0 0.0
        %804 = vmatpush.msra.mxu0 0.0
        %v805 = vand.u32 %v678, 4294901760
        %v806 = vsub.f32 %v678, %v805
        %v807 = vand.u32 %v806, 4294901760
        %808 = vmatpush.msra.mxu0 %v807
        %v809 = vand.u32 %v677, 4294901760
        %v810 = vsub.f32 %v677, %v809
        %v811 = vand.u32 %v810, 4294901760
        %812 = vmatpush.msra.mxu0 %v811
        %v813 = vand.u32 %v680, 4294901760
        %814 = vmatmul.f32.gmra.mxu0 %v813
        %v815 = vpop.f32.mrf.mxu0
        %v816 = vadd.f32 %v789, %v815
        %817 = vdwg.mxu0
        %818 = vmatpush.msra.mxu0 0.0
        %819 = vmatpush.msra.mxu0 0.0
        %820 = vmatpush.msra.mxu0 0.0
        %821 = vmatpush.msra.mxu0 0.0
        %822 = vmatpush.msra.mxu0 0.0
        %823 = vmatpush.msra.mxu0 0.0
        %824 = vmatpush.msra.mxu0 0.0
        %825 = vmatpush.msra.mxu0 0.0
        %826 = vmatpush.msra.mxu0 0.0
        %827 = vmatpush.msra.mxu0 0.0
        %828 = vmatpush.msra.mxu0 0.0
        %829 = vmatpush.msra.mxu0 0.0
        %830 = vmatpush.msra.mxu0 0.0
        %831 = vmatpush.msra.mxu0 0.0
        %v832 = vand.u32 %v678, 4294901760
        %833 = vmatpush.msra.mxu0 %v832
        %v834 = vand.u32 %v677, 4294901760
        %835 = vmatpush.msra.mxu0 %v834
        %v836 = vand.u32 %v680, 4294901760
        %837 = vmatmul.f32.gmra.mxu0 %v836
        %v838 = vpop.f32.mrf.mxu0
        %v839 = vadd.f32 %v816, %v838
        %840 = vdwg.mxu0
        %v841 = vadd.f32 %v672, %v839
        %s842 = scalar_lea.vmem [#allocation2], 24
        %v843 = vld [vmem:[%s842] sm:$0xff]
        %s844 = scalar_lea.vmem [#allocation9], 48
        %v845 = vld [vmem:[%s844] sm:$0xff]
        %v846 = vld [vmem:[%s844 + $0x8] sm:$0xff]
        %v848 = vsel %vm349, %v843, 0
        %850 = vmatpush.msra.mxu0 0.0
        %851 = vmatpush.msra.mxu0 0.0
        %852 = vmatpush.msra.mxu0 0.0
        %853 = vmatpush.msra.mxu0 0.0
        %854 = vmatpush.msra.mxu0 0.0
        %855 = vmatpush.msra.mxu0 0.0
        %856 = vmatpush.msra.mxu0 0.0
        %857 = vmatpush.msra.mxu0 0.0
        %858 = vmatpush.msra.mxu0 0.0
        %859 = vmatpush.msra.mxu0 0.0
        %860 = vmatpush.msra.mxu0 0.0
        %861 = vmatpush.msra.mxu0 0.0
        %862 = vmatpush.msra.mxu0 0.0
        %863 = vmatpush.msra.mxu0 0.0
        %v864 = vand.u32 %v846, 4294901760
        %865 = vmatpush.msra.mxu0 %v864
        %v866 = vand.u32 %v845, 4294901760
        %867 = vmatpush.msra.mxu0 %v866
        %v868 = vand.u32 %v848, 4294901760
        %v869 = vsub.f32 %v848, %v868
        %v870 = vand.u32 %v869, 4294901760
        %v871 = vsub.f32 %v869, %v870
        %v872 = vand.u32 %v871, 4294901760
        %873 = vmatmul.f32.gmra.mxu0 %v872
        %v874 = vpop.f32.mrf.mxu0
        %v875 = vadd.f32 0.0, %v874
        %876 = vdwg.mxu0
        %877 = vmatpush.msra.mxu0 0.0
        %878 = vmatpush.msra.mxu0 0.0
        %879 = vmatpush.msra.mxu0 0.0
        %880 = vmatpush.msra.mxu0 0.0
        %881 = vmatpush.msra.mxu0 0.0
        %882 = vmatpush.msra.mxu0 0.0
        %883 = vmatpush.msra.mxu0 0.0
        %884 = vmatpush.msra.mxu0 0.0
        %885 = vmatpush.msra.mxu0 0.0
        %886 = vmatpush.msra.mxu0 0.0
        %887 = vmatpush.msra.mxu0 0.0
        %888 = vmatpush.msra.mxu0 0.0
        %889 = vmatpush.msra.mxu0 0.0
        %890 = vmatpush.msra.mxu0 0.0
        %v891 = vand.u32 %v846, 4294901760
        %v892 = vsub.f32 %v846, %v891
        %v893 = vand.u32 %v892, 4294901760
        %v894 = vsub.f32 %v892, %v893
        %v895 = vand.u32 %v894, 4294901760
        %896 = vmatpush.msra.mxu0 %v895
        %v897 = vand.u32 %v845, 4294901760
        %v898 = vsub.f32 %v845, %v897
        %v899 = vand.u32 %v898, 4294901760
        %v900 = vsub.f32 %v898, %v899
        %v901 = vand.u32 %v900, 4294901760
        %902 = vmatpush.msra.mxu0 %v901
        %v903 = vand.u32 %v848, 4294901760
        %904 = vmatmul.f32.gmra.mxu0 %v903
        %v905 = vpop.f32.mrf.mxu0
        %v906 = vadd.f32 %v875, %v905
        %907 = vdwg.mxu0
        %908 = vmatpush.msra.mxu0 0.0
        %909 = vmatpush.msra.mxu0 0.0
        %910 = vmatpush.msra.mxu0 0.0
        %911 = vmatpush.msra.mxu0 0.0
        %912 = vmatpush.msra.mxu0 0.0
        %913 = vmatpush.msra.mxu0 0.0
        %914 = vmatpush.msra.mxu0 0.0
        %915 = vmatpush.msra.mxu0 0.0
        %916 = vmatpush.msra.mxu0 0.0
        %917 = vmatpush.msra.mxu0 0.0
        %918 = vmatpush.msra.mxu0 0.0
        %919 = vmatpush.msra.mxu0 0.0
        %920 = vmatpush.msra.mxu0 0.0
        %921 = vmatpush.msra.mxu0 0.0
        %v922 = vand.u32 %v846, 4294901760
        %v923 = vsub.f32 %v846, %v922
        %924 = vmatpush.msra.mxu0 %v923
        %v925 = vand.u32 %v845, 4294901760
        %v926 = vsub.f32 %v845, %v925
        %927 = vmatpush.msra.mxu0 %v926
        %v928 = vand.u32 %v848, 4294901760
        %v929 = vsub.f32 %v848, %v928
        %930 = vmatmul.f32.gmra.mxu0 %v929
        %v931 = vpop.f32.mrf.mxu0
        %v932 = vadd.f32 %v906, %v931
        %933 = vdwg.mxu0
        %934 = vmatpush.msra.mxu0 0.0
        %935 = vmatpush.msra.mxu0 0.0
        %936 = vmatpush.msra.mxu0 0.0
        %937 = vmatpush.msra.mxu0 0.0
        %938 = vmatpush.msra.mxu0 0.0
        %939 = vmatpush.msra.mxu0 0.0
        %940 = vmatpush.msra.mxu0 0.0
        %941 = vmatpush.msra.mxu0 0.0
        %942 = vmatpush.msra.mxu0 0.0
        %943 = vmatpush.msra.mxu0 0.0
        %944 = vmatpush.msra.mxu0 0.0
        %945 = vmatpush.msra.mxu0 0.0
        %946 = vmatpush.msra.mxu0 0.0
        %947 = vmatpush.msra.mxu0 0.0
        %v948 = vand.u32 %v846, 4294901760
        %949 = vmatpush.msra.mxu0 %v948
        %v950 = vand.u32 %v845, 4294901760
        %951 = vmatpush.msra.mxu0 %v950
        %v952 = vand.u32 %v848, 4294901760
        %v953 = vsub.f32 %v848, %v952
        %v954 = vand.u32 %v953, 4294901760
        %955 = vmatmul.f32.gmra.mxu0 %v954
        %v956 = vpop.f32.mrf.mxu0
        %v957 = vadd.f32 %v932, %v956
        %958 = vdwg.mxu0
        %959 = vmatpush.msra.mxu0 0.0
        %960 = vmatpush.msra.mxu0 0.0
        %961 = vmatpush.msra.mxu0 0.0
        %962 = vmatpush.msra.mxu0 0.0
        %963 = vmatpush.msra.mxu0 0.0
        %964 = vmatpush.msra.mxu0 0.0
        %965 = vmatpush.msra.mxu0 0.0
        %966 = vmatpush.msra.mxu0 0.0
        %967 = vmatpush.msra.mxu0 0.0
        %968 = vmatpush.msra.mxu0 0.0
        %969 = vmatpush.msra.mxu0 0.0
        %970 = vmatpush.msra.mxu0 0.0
        %971 = vmatpush.msra.mxu0 0.0
        %972 = vmatpush.msra.mxu0 0.0
        %v973 = vand.u32 %v846, 4294901760
        %v974 = vsub.f32 %v846, %v973
        %v975 = vand.u32 %v974, 4294901760
        %976 = vmatpush.msra.mxu0 %v975
        %v977 = vand.u32 %v845, 4294901760
        %v978 = vsub.f32 %v845, %v977
        %v979 = vand.u32 %v978, 4294901760
        %980 = vmatpush.msra.mxu0 %v979
        %v981 = vand.u32 %v848, 4294901760
        %982 = vmatmul.f32.gmra.mxu0 %v981
        %v983 = vpop.f32.mrf.mxu0
        %v984 = vadd.f32 %v957, %v983
        %985 = vdwg.mxu0
        %986 = vmatpush.msra.mxu0 0.0
        %987 = vmatpush.msra.mxu0 0.0
        %988 = vmatpush.msra.mxu0 0.0
        %989 = vmatpush.msra.mxu0 0.0
        %990 = vmatpush.msra.mxu0 0.0
        %991 = vmatpush.msra.mxu0 0.0
        %992 = vmatpush.msra.mxu0 0.0
        %993 = vmatpush.msra.mxu0 0.0
        %994 = vmatpush.msra.mxu0 0.0
        %995 = vmatpush.msra.mxu0 0.0
        %996 = vmatpush.msra.mxu0 0.0
        %997 = vmatpush.msra.mxu0 0.0
        %998 = vmatpush.msra.mxu0 0.0
        %999 = vmatpush.msra.mxu0 0.0
        %v1000 = vand.u32 %v846, 4294901760
        %1001 = vmatpush.msra.mxu0 %v1000
        %v1002 = vand.u32 %v845, 4294901760
        %1003 = vmatpush.msra.mxu0 %v1002
        %v1004 = vand.u32 %v848, 4294901760
        %1005 = vmatmul.f32.gmra.mxu0 %v1004
        %v1006 = vpop.f32.mrf.mxu0
        %v1007 = vadd.f32 %v984, %v1006
        %1008 = vdwg.mxu0
        %v1009 = vadd.f32 %v841, %v1007
        %s1010 = smul.u32 %s28, 8
        %s1011 = scalar_lea.vmem [#allocation3], %s1010
        %1012 = vst [vmem:[%s1011] sm:$0xff] %v1009
        // Predicated region
        $region57: #{tpu_custom_call.1} parent=35 // pred_check
          %p1013 = pneg %p279
        $region58: #{tpu_custom_call.1} parent=35 // pred_check_branch
          %1015 = sbr.rel (%p1013) target = $region60
        $region59: #{tpu_custom_call.1} parent=35 // pred_region
          %v1016 = vld [vmem:[#allocation3] sm:$0xff]
          %v1017 = vld [vmem:[#allocation11] sm:$0x1]
          %v1018 = vperm.slane %v1017, 0
          %v1019 = vadd.f32 %v1016, %v1018
          %1020 = vadd.xlane.f32.xlu0 %v1019
          %v1021 = vpop.xlane.xlu0 %1020
          %v1022 = vadd.f32 %v1021, 0.0
          %v1023 = vmul.f32 %v1019, %v1019
          %1024 = vadd.xlane.f32.xlu0 %v1023
          %v1025 = vpop.xlane.xlu0 %1024
          %v1026 = vadd.f32 %v1025, 0.0
          %v1027 = vmul.f32 %v1022, 0.03125
          %v1028 = vmul.f32 %v1026, 0.03125
          %v1029 = vmul.f32 %v1027, %v1027
          %v1030 = vsub.f32 %v1028, %v1029
          %v1031 = vmax.f32 %v1030, 0.0
          %v1032 = vadd.f32 %v1031, 1e-05
          %v1033 = vrsqrt.pop %v1032
          %v1034 = vmul.f32 %v1033, %v1032
          %v1035 = vmul.f32 %v1034, %v1033
          %v1036 = vmul.f32 0.5, %v1035
          %v1037 = vsub.f32 1.5, %v1036
          %v1038 = vmul.f32 %v1033, %v1037
          %vm1039 = vweird.f32 %v1032
          %vm1040 = vweird.f32 %v1033
          %vm1041 = vmor %vm1039, %vm1040
          %v1042 = vsel %vm1041, %v1033, %v1038
          %v1043 = vsub.f32 %v1019, %v1027
          %v1044 = vmul.f32 %v1043, %v1042
          %v1045 = vld [vmem:[#allocation11 + $0x1] sm:$0x1]
          %v1046 = vperm.slane %v1045, 0
          %v1047 = vmul.f32 %v1044, %v1046
          %v1048 = vld [vmem:[#allocation11 + $0x2] sm:$0x1]
          %v1049 = vperm.slane %v1048, 0
          %v1050 = vadd.f32 %v1047, %v1049
          %v1051 = vxor.u32 %v1050, 2147483648
          %v1052 = vmul.f32 %v1051, 1.442695
          %v1053 = vpow.pop %v1052
          %v1054 = vadd.f32 %v1053, 1.0
          %v1055 = vrcp.pop %v1054
          %v1056 = vmul.f32 %v1054, %v1055
          %v1057 = vsub.f32 1.0, %v1056
          %v1058 = vmul.f32 %v1055, %v1057
          %v1059 = vadd.f32 %v1055, %v1058
          %vm1060 = vweird.f32 %v1054
          %vm1061 = vweird.f32 %v1055
          %vm1062 = vmor %vm1060, %vm1061
          %v1063 = vsel %vm1062, %v1055, %v1059
          %v1064 = vand.u32 2147483647, %v1054
          %vm1065 = vcmp.eq.f32.partialorder %v1064, 8.507059e+37
          %v1066 = vand.u32 %v1054, 2147483648
          %v1067 = vor.u32 1.1754944e-38, %v1066
          %v1068 = vsel %vm1065, %v1067, %v1063
          %v1069 = vmul.f32 1.0, %v1068
          %v1070 = vmul.f32 %v1050, %v1069
          %1071 = vst [vmem:[%s278] sm:$0xff] %v1070
        $region60: #{tpu_custom_call.1} parent=35 // pred_fallthru
          _
        %s1072 = sand.u32 %s137, 1
        %s1073 = scalar_lea.sflag [#allocation6], %s1072
        %s1074 = sand.u32 %s137, 1
        %s1075 = smul.addr %s1074, 8
        %s1076 = scalar_lea.vmem [#allocation12], %s1075
        // Predicated region
        $region61: #{tpu_custom_call.1} parent=35 // pred_check
          %p1077 = pneg %p147
        $region62: #{tpu_custom_call.1} parent=35 // pred_check_branch
          %1079 = sbr.rel (%p1077) target = $region64
        $region63: #{tpu_custom_call.1} parent=35 // pred_region
          %1081 = vsyncadd %s1073, 0
          %s1082 = smul.addr %s27, 8
          %s1083 = scalar_lea.hbm %s4, %s1082
          %s1085 = sshll.u32 %s1076, 4
          %s1086 = int_to_ptr.vmem [resolvable:$true] %s1085
          %s1087 = sshll.u32 %s1083, 4
          %s1088 = int_to_ptr.hbm [resolvable:$true] %s1087
          %1090 = dma.vmem_to_hbm [thread:$0]  %s1086, 128, %s1088, %s1073
        $region64: #{tpu_custom_call.1} parent=35 // pred_fallthru
          _
      $region36: #{tpu_custom_call.1} parent=5 // pred_fallthru
        _
      %p1091 = scmp.le.s32.totalorder 2, %s18
      // Predicated region
      $region65: #{tpu_custom_call.1} parent=5 // pred_check
        %p1092 = pneg %p1091
      $region66: #{tpu_custom_call.1} parent=5 // pred_check_branch
        %1094 = sbr.rel (%p1092) target = $region68
      $region67: #{tpu_custom_call.1} parent=5 // pred_region
        %s1095 = ssub.s32 %s18, 2
        // Predicated region
        $region69: #{tpu_custom_call.1} parent=67 // pred_check
          %p1096 = pneg %p153
        $region70: #{tpu_custom_call.1} parent=67 // pred_check_branch
          %1098 = sbr.rel (%p1096) target = $region72
        $region71: #{tpu_custom_call.1} parent=67 // pred_region
          %s1099 = sand.u32 %s138, 1
          %s1100 = scalar_lea.sflag [#allocation6], %s1099
          %s1101 = sand.u32 %s138, 1
          %s1102 = smul.addr %s1101, 8
          %s1103 = scalar_lea.vmem [#allocation12], %s1102
          %1105 = dma.done %s1100, 128
        $region72: #{tpu_custom_call.1} parent=67 // pred_fallthru
          _
      $region68: #{tpu_custom_call.1} parent=5 // pred_fallthru
        _
    $region6: #{tpu_custom_call.1} parent=1 // loop_footer
      %s22 = sadd.s32 1, %s18
    $region7: #{tpu_custom_call.1} parent=1 // loop_footer_branch
      %17 = sbr.rel target = $region3
    $region8: #{tpu_custom_call.1} parent=1 // loop_exit
      _
    %1106 = vsyncpa [#allocation5], 1
    %s1107 = scalar_lea.sflag [#allocation5], 1
    %1108 = vsyncpa %s1107, 1
    %1109 = vsyncpa [#allocation10], 1
    %1110 = vsyncpa [#allocation6], 1
    %s1111 = scalar_lea.sflag [#allocation6], 1
    %1112 = vsyncpa %s1111, 1
    %1113 = vsyncpa [#allocation7], 1
    %s1114 = scalar_lea.sflag [#allocation7], 1
    %1115 = vsyncpa %s1114, 1

</llo_original>
